<compile_context>
chip_gen: v7x
topology: tpu7x:2x2x1
jax: 0.10.0
libtpu: 0.0.40
codegen_flags: <defaults>
</compile_context>

<pallas_src>
import functools

import jax
import jax.numpy as jnp
from jax import lax
from jax.experimental import pallas as pl
from jax.experimental.pallas import tpu as pltpu


def _inv_res_kernel(x_ref, w1_ref, b1_ref, wdw_ref, b2_ref, w3_ref, b3_ref,
                    out_ref, pad_ref,
                    *, H, W, Cin, Chid, Cout, stride, strip_out, use_res):
  """One (batch, H-strip) step of the fused inverted-residual block.

  x_ref   : (1, H, W, Cin)          full input image, resident across strips
  w1_ref  : (Cin, Chid)   bf16      1x1 expand weights (BN scale folded)
  wdw_ref : (9, Chid)     f32       3x3 depthwise taps, tap-major, scale folded
  w3_ref  : (Chid, Cout)  bf16      1x1 project weights (BN scale folded)
  b*_ref  : (1, C)        f32       folded BatchNorm shifts
  out_ref : (1, strip_out, W, Cout) output strip
  pad_ref : (pad_rows, W+2, Chid)   f32 scratch: zero-padded expand output
  """
  s = pl.program_id(1)
  last = pl.num_programs(1) - 1
  th_out = strip_out                       # output rows produced by this strip
  th_in = stride * th_out                  # image rows owned by this strip
  pad_rows = th_in + 2 if stride == 1 else th_in + 1
  row0 = s * th_in                         # first image row of this strip
  f32 = jnp.float32

  w1 = w1_ref[...]
  b1 = b1_ref[...]
  wdw = wdw_ref[...]
  b2 = b2_ref[...]
  w3 = w3_ref[...]
  b3 = b3_ref[...]

  def expand_rows(xs, nrows):
    """1x1 expand conv (+folded BN) + ReLU6 on gathered rows (bf16 MXU)."""
    h = jnp.dot(xs.reshape(nrows * W, Cin).astype(jnp.bfloat16), w1,
                preferred_element_type=f32)
    h = jnp.clip(h + b1, 0.0, 6.0)
    return h.reshape(nrows, W, Chid)

  # ---- padded expand output for this strip (pad row p <-> image row row0-1+p)
  pad_ref[1:th_in + 1, 1:W + 1, :] = expand_rows(
      x_ref[:, pl.ds(row0, th_in)], th_in)

  if stride == 1:
    # Top + bottom halo rows recomputed in ONE fused matmul (neighbour strips);
    # zeroed at the image edges below.
    top = jnp.maximum(row0 - 1, 0)
    bot = jnp.minimum(row0 + th_in, H - 1)
    halo = jnp.concatenate(
        [x_ref[:, pl.ds(top, 1)], x_ref[:, pl.ds(bot, 1)]], axis=1)
    h2 = expand_rows(halo, 2)
    pad_ref[0:1, 1:W + 1, :] = h2[0:1]
    pad_ref[th_in + 1:th_in + 2, 1:W + 1, :] = h2[1:2]

    @pl.when(s == last)
    def _():
      pad_ref[th_in + 1:th_in + 2, 1:W + 1, :] = jnp.zeros((1, W, Chid), f32)
  else:
    # Stride 2: only a top halo row exists (taps never reach below the strip).
    pad_ref[0:1, 1:W + 1, :] = expand_rows(
        x_ref[:, pl.ds(jnp.maximum(row0 - 1, 0), 1)], 1)

  @pl.when(s == 0)
  def _():
    pad_ref[0:1, 1:W + 1, :] = jnp.zeros((1, W, Chid), f32)

  # Left/right 1-px zero-pad columns.  The interior is fully overwritten every
  # step, so strips carry no state -> both grid axes are safely "parallel".
  pad_ref[:, 0:1, :] = jnp.zeros((pad_rows, 1, Chid), f32)
  pad_ref[:, W + 1:W + 2, :] = jnp.zeros((pad_rows, 1, Chid), f32)

  # ---- 3x3 depthwise conv (+ folded BN) + ReLU6 -----------------------------
  # Three column-shifted views (2 sublane realignments); the row shifts land on
  # the cheap major axis.  acc is initialised from the first tap.
  acc = None
  for dx in range(3):
    cv = pad_ref[:, dx:dx + W, :]                             # (pad_rows, W, Chid)
    for dy in range(3):
      if stride == 1:
        rows = cv[dy:dy + th_out]
      else:
        # Even image rows only, via leading-dim reshape (no strided slices).
        base, sel = (dy, 0) if dy < 2 else (1, 1)
        rows = cv[base:base + 2 * th_out].reshape(th_out, 2, W, Chid)[:, sel]
      k = dy * 3 + dx
      term = rows * wdw[k:k + 1]
      acc = term if acc is None else acc + term
  acc = jnp.clip(acc + b2, 0.0, 6.0)                          # (th_out, W, Chid)

  # ---- 1x1 project conv (+ folded BN); linear bottleneck --------------------
  y = jnp.dot(acc.reshape(th_out * W, Chid).astype(jnp.bfloat16), w3,
              preferred_element_type=f32)
  y = y + b3

  if use_res:  # only possible when stride == 1 and Cin == Cout
    xs = x_ref[:, pl.ds(row0, th_out)].astype(f32)
    y = y + xs.reshape(th_out * W, Cin)

  # Lane-dense (th_out, W*Cout) store was evaluated (review item) but needs a
  # minor-dim-changing reshape; kept as plain NHWC for guaranteed lowering.
  out_ref[...] = y.reshape(1, th_out, W, Cout).astype(out_ref.dtype)


def _vmem_capacity_bytes():
  try:
    return int(pltpu.get_tpu_info().vmem_capacity_bytes)
  except Exception:
    return 64 << 20                         # conservative (v7x-sized) fallback


def _pick_strip_rows(Ho, W, Chid, stride, requested):
  """Output rows per strip: generation-aware VMEM budget, must divide Ho."""
  if requested is None:
    cap = _vmem_capacity_bytes()
    # Chid-wide live temporaries target ~cap/6: ~21 MiB on 128 MiB parts
    # (v5e/v6e), ~10 MiB on v7x's 64 MiB.
    budget = min(24 << 20, max(4 << 20, cap // 6))
    lane = lambda c: -(-c // 128) * 128
    per_row = stride * (W + 2) * lane(Chid) * 4 * 6
    requested = max(1, budget // max(per_row, 1))
    # Keep the expand/project MXU matmuls fed: M = stride*rows*W >= ~512.
    requested = max(requested, -(-512 // (stride * W)))
  rows = max(1, min(int(requested), Ho))
  while Ho % rows:
    rows -= 1
  return rows


def inverted_residual_nhwc(x, params, stride, *, strip_rows=None):
  """Fused inverted-residual block on NHWC activations (layout kept end-to-end)."""
  N, H, W, Cin = x.shape
  Chid = params['w1'].shape[1]
  Cout = params['w3'].shape[1]
  assert stride in (1, 2)
  if stride == 2:
    assert H % 2 == 0 and W % 2 == 0
  Ho = H // stride
  use_res = (stride == 1) and (Cin == Cout)

  th_out = _pick_strip_rows(Ho, W, Chid, stride, strip_rows)
  S = Ho // th_out
  pad_rows = stride * th_out + (2 if stride == 1 else 1)

  # Fold the BN scales into the conv weights in f32 BEFORE the bf16 cast; only
  # the additive shifts stay in-kernel.
  w1f = (params['w1'] * params['s1'][None, :]).astype(jnp.bfloat16)
  wdw9 = (params['wdw'] * params['s2'][None, None, :]
          ).reshape(9, Chid).astype(jnp.float32)
  w3f = (params['w3'] * params['s3'][None, :]).astype(jnp.bfloat16)
  row = lambda v: v.reshape(1, -1).astype(jnp.float32)

  kern = functools.partial(_inv_res_kernel, H=H, W=W, Cin=Cin, Chid=Chid,
                           Cout=Cout, stride=stride, strip_out=th_out,
                           use_res=use_res)

  def rep(shape):
    nd = len(shape)
    return pl.BlockSpec(shape, lambda n, s, _nd=nd: (0,) * _nd)

  # Scoped-VMEM budget with headroom: account for (8,128)-tile padding of the
  # small-channel blocks, double-buffering, pad scratch and live f32 temps,
  # then clamp to <= 3/4 of physical VMEM (<= 48 MiB on v7x, <= 96 MiB on
  # 128 MiB parts) so the compiler keeps internal scratch/spill room.
  lanes = lambda c: -(-c // 128) * 128
  subs = lambda r: -(-r // 8) * 8
  esz = x.dtype.itemsize
  est = (2 * H * subs(W) * lanes(Cin) * esz
         + 2 * th_out * subs(W) * lanes(Cout) * esz
         + pad_rows * subs(W + 2) * lanes(Chid) * 4
         + 8 * stride * th_out * subs(W) * lanes(Chid) * 4
         + 4 * (Cin + Cout + 16) * lanes(Chid) * 4)
  cap = _vmem_capacity_bytes()
  vmem_limit = int(min(max(32 << 20, 2 * est), min(96 << 20, (3 * cap) // 4)))

  y = pl.pallas_call(
      kern,
      out_shape=jax.ShapeDtypeStruct((N, Ho, W, Cout), x.dtype),
      grid=(N, S),
      in_specs=[
          pl.BlockSpec((1, H, W, Cin), lambda n, s: (n, 0, 0, 0)),
          rep((Cin, Chid)), rep((1, Chid)),                    # w1', b1
          rep((9, Chid)), rep((1, Chid)),                      # dw taps', b2
          rep((Chid, Cout)), rep((1, Cout)),                   # w3', b3
      ],
      out_specs=pl.BlockSpec((1, th_out, W, Cout), lambda n, s: (n, s, 0, 0)),
      scratch_shapes=[pltpu.VMEM((pad_rows, W + 2, Chid), jnp.float32)],
      compiler_params=pltpu.CompilerParams(
          dimension_semantics=("parallel", "parallel"),
          vmem_limit_bytes=vmem_limit),
  )(x, w1f, row(params['b1']), wdw9, row(params['b2']), w3f, row(params['b3']))

  if stride == 2:
    # Rows were already subsampled in-kernel; the column subsample stays a
    # cheap XLA slice (in-kernel it would need a strided sublane value read).
    y = y[:, :, ::2, :]
  return y


def inverted_residual_pallas(x_nchw, params, stride, *, strip_rows=None):
  """PyTorch-layout (NCHW) wrapper around the NHWC kernel."""
  x = jnp.transpose(x_nchw, (0, 2, 3, 1))                     # NCHW -> NHWC
  y = inverted_residual_nhwc(x, params, stride, strip_rows=strip_rows)
  return jnp.transpose(y, (0, 3, 1, 2))                       # NHWC -> NCHW


# ----------------------- parameter construction -----------------------------

def _fold_bn(gamma, beta, mean, var, eps=1e-5):
  scale = gamma / jnp.sqrt(var + eps)
  shift = beta - mean * scale
  return scale, shift


def init_params(key, inp, oup, expand_ratio):
  hid = inp * expand_ratio
  ks = jax.random.split(key, 6)

  def bn(k, c):
    k0, k1, k2, k3 = jax.random.split(k, 4)
    gamma = jax.random.uniform(k0, (c,), jnp.float32, 0.5, 1.5)
    beta = 0.1 * jax.random.normal(k1, (c,), jnp.float32)
    mean = 0.1 * jax.random.normal(k2, (c,), jnp.float32)
    var = jax.random.uniform(k3, (c,), jnp.float32, 0.5, 1.5)
    return _fold_bn(gamma, beta, mean, var)

  w1 = 0.3 * jax.random.normal(ks[0], (inp, hid), jnp.float32)     # 1x1 expand
  s1, b1 = bn(ks[1], hid)
  wdw = 0.3 * jax.random.normal(ks[2], (3, 3, hid), jnp.float32)   # depthwise
  s2, b2 = bn(ks[3], hid)
  w3 = 0.3 * jax.random.normal(ks[4], (hid, oup), jnp.float32)     # 1x1 project
  s3, b3 = bn(ks[5], oup)
  return dict(w1=w1, s1=s1, b1=b1, wdw=wdw, s2=s2, b2=b2,
              w3=w3, s3=s3, b3=b3)


# ----------------------- pure-JAX reference ---------------------------------

def inverted_residual_ref(x_nchw, params, stride):
  """Reference with the same precision policy as the kernel: the two 1x1 convs
  use bf16 activations and bf16 BN-folded weights with f32 accumulation;
  everything else (depthwise, shifts, clips, residual) is f32."""
  N, Cin, H, W = x_nchw.shape
  Chid = params['w1'].shape[1]
  Cout = params['w3'].shape[1]
  x = jnp.transpose(x_nchw, (0, 2, 3, 1))
  dn = ('NHWC', 'HWIO', 'NHWC')
  r = lambda v: v.reshape(1, 1, 1, -1)
  bf16 = jnp.bfloat16

  w1f = (params['w1'] * params['s1'][None, :]).astype(bf16)
  wdwf = (params['wdw'] * params['s2'][None, None, :]).astype(jnp.float32)
  w3f = (params['w3'] * params['s3'][None, :]).astype(bf16)

  h = lax.conv_general_dilated(
      x.astype(bf16), w1f.reshape(1, 1, Cin, Chid), (1, 1), 'VALID',
      dimension_numbers=dn, preferred_element_type=jnp.float32)
  h = jnp.clip(h + r(params['b1']), 0.0, 6.0)
  h = lax.conv_general_dilated(
      h, wdwf.reshape(3, 3, 1, Chid), (stride, stride),
      [(1, 1), (1, 1)], dimension_numbers=dn, feature_group_count=Chid)
  h = jnp.clip(h + r(params['b2']), 0.0, 6.0)
  y = lax.conv_general_dilated(
      h.astype(bf16), w3f.reshape(1, 1, Chid, Cout), (1, 1), 'VALID',
      dimension_numbers=dn, preferred_element_type=jnp.float32)
  y = y + r(params['b3'])
  if stride == 1 and Cin == Cout:
    y = y + x
  return jnp.transpose(y, (0, 3, 1, 2))


# ----------------------------- demo ------------------------------------------

if __name__ == "__main__":
  key = jax.random.PRNGKey(0)
  kx1, kp1, kx2, kp2 = jax.random.split(key, 4)

  # Config A: residual branch (stride=1, inp == oup); strip_rows=8 -> 2 strips,
  # exercising the fused halo-recompute path.
  x1 = jax.random.normal(kx1, (2, 4, 16, 16), jnp.float32)   # NCHW like torch
  p1 = init_params(kp1, inp=4, oup=4, expand_ratio=2)
  y1 = jax.block_until_ready(
      inverted_residual_pallas(x1, p1, stride=1, strip_rows=8))
  r1 = inverted_residual_ref(x1, p1, stride=1)
  assert y1.shape == (2, 4, 16, 16), y1.shape
  assert jnp.allclose(y1, r1, atol=2e-2, rtol=2e-2), \
      float(jnp.max(jnp.abs(y1 - r1)))

  # Config B: non-residual branch (stride=2, inp != oup); 2 output strips.
  x2 = jax.random.normal(kx2, (2, 4, 16, 16), jnp.float32)
  p2 = init_params(kp2, inp=4, oup=8, expand_ratio=3)
  y2 = jax.block_until_ready(
      inverted_residual_pallas(x2, p2, stride=2, strip_rows=4))
  r2 = inverted_residual_ref(x2, p2, stride=2)
  assert y2.shape == (2, 8, 8, 8), y2.shape
  assert jnp.allclose(y2, r2, atol=2e-2, rtol=2e-2), \
      float(jnp.max(jnp.abs(y2 - r2)))

  # Config C: generation-aware auto strip size (single strip) on config A.
  y3 = jax.block_until_ready(inverted_residual_pallas(x1, p1, stride=1))
  assert jnp.allclose(y3, r1, atol=2e-2, rtol=2e-2), \
      float(jnp.max(jnp.abs(y3 - r1)))

  print("KERNEL_OK")
</pallas_src>

<mosaic_0001>
module attributes {stable_mosaic.version = 11 : i64} {
  func.func @_inv_res_kernel(%arg0: i32, %arg1: i32, %arg2: memref<1x16x16x4xf32, #tpu.memory_space<vmem>>, %arg3: memref<4x8xbf16, #tpu.memory_space<vmem>>, %arg4: memref<1x8xf32, #tpu.memory_space<vmem>>, %arg5: memref<9x8xf32, #tpu.memory_space<vmem>>, %arg6: memref<1x8xf32, #tpu.memory_space<vmem>>, %arg7: memref<8x4xbf16, #tpu.memory_space<vmem>>, %arg8: memref<1x4xf32, #tpu.memory_space<vmem>>, %arg9: memref<1x8x16x4xf32, #tpu.memory_space<vmem>>, %arg10: memref<10x18x8xf32, #tpu.memory_space<vmem>>) attributes {dimension_semantics = [#tpu.dimension_semantics<parallel>, #tpu.dimension_semantics<parallel>], iteration_bounds = array<i64: 2, 2>, scalar_prefetch = 0 : i64, scratch_operands = 1 : i64, tpu.core_type = #tpu.core_type<tc>, window_params = [{transform_indices = @transform_0, window_bounds = array<i64: 1, 16, 16, 4>}, {pipeline_mode = #tpu.pipeline_mode<synchronous>, transform_indices = @transform_1, window_bounds = array<i64: 4, 8>}, {pipeline_mode = #tpu.pipeline_mode<synchronous>, transform_indices = @transform_2, window_bounds = array<i64: 1, 8>}, {pipeline_mode = #tpu.pipeline_mode<synchronous>, transform_indices = @transform_3, window_bounds = array<i64: 9, 8>}, {pipeline_mode = #tpu.pipeline_mode<synchronous>, transform_indices = @transform_4, window_bounds = array<i64: 1, 8>}, {pipeline_mode = #tpu.pipeline_mode<synchronous>, transform_indices = @transform_5, window_bounds = array<i64: 8, 4>}, {pipeline_mode = #tpu.pipeline_mode<synchronous>, transform_indices = @transform_6, window_bounds = array<i64: 1, 4>}, {transform_indices = @transform_7, window_bounds = array<i64: 1, 8, 16, 4>}]} {
    %c8_i32 = arith.constant 8 : i32
    %0 = arith.muli %arg1, %c8_i32 : i32
    %c0 = arith.constant 0 : index
    %c0_0 = arith.constant 0 : index
    %1 = vector.load %arg3[%c0, %c0_0] : memref<4x8xbf16, #tpu.memory_space<vmem>>, vector<4x8xbf16>
    %c0_1 = arith.constant 0 : index
    %c0_2 = arith.constant 0 : index
    %2 = vector.load %arg4[%c0_1, %c0_2] : memref<1x8xf32, #tpu.memory_space<vmem>>, vector<1x8xf32>
    %c0_3 = arith.constant 0 : index
    %c0_4 = arith.constant 0 : index
    %3 = vector.load %arg5[%c0_3, %c0_4] : memref<9x8xf32, #tpu.memory_space<vmem>>, vector<9x8xf32>
    %c0_5 = arith.constant 0 : index
    %c0_6 = arith.constant 0 : index
    %4 = vector.load %arg6[%c0_5, %c0_6] : memref<1x8xf32, #tpu.memory_space<vmem>>, vector<1x8xf32>
    %c0_7 = arith.constant 0 : index
    %c0_8 = arith.constant 0 : index
    %5 = vector.load %arg7[%c0_7, %c0_8] : memref<8x4xbf16, #tpu.memory_space<vmem>>, vector<8x4xbf16>
    %c0_9 = arith.constant 0 : index
    %c0_10 = arith.constant 0 : index
    %6 = vector.load %arg8[%c0_9, %c0_10] : memref<1x4xf32, #tpu.memory_space<vmem>>, vector<1x4xf32>
    %c0_11 = arith.constant 0 : index
    %7 = arith.index_cast %0 : i32 to index
    %c0_12 = arith.constant 0 : index
    %c0_13 = arith.constant 0 : index
    %8 = vector.load %arg2[%c0_11, %7, %c0_12, %c0_13] : memref<1x16x16x4xf32, #tpu.memory_space<vmem>>, vector<1x8x16x4xf32>
    %9 = vector.shape_cast %8 : vector<1x8x16x4xf32> to vector<128x4xf32>
    %10 = arith.truncf %9 : vector<128x4xf32> to vector<128x4xbf16>
    %cst = arith.constant dense<0.000000e+00> : vector<128x8xf32>
    %11 = tpu.matmul %10, %1, %cst {dimension_numbers = #tpu.dot_dimension_numbers<[1], [0], [0], [1], [0, 0, 1, 1], [], []>} : vector<128x4xbf16>, vector<4x8xbf16>, vector<128x8xf32> -> vector<128x8xf32>
    %12 = vector.broadcast %2 : vector<1x8xf32> to vector<128x8xf32>
    %13 = arith.addf %11, %12 : vector<128x8xf32>
    %cst_14 = arith.constant 0.000000e+00 : f32
    %cst_15 = arith.constant 6.000000e+00 : f32
    %14 = vector.broadcast %cst_14 : f32 to vector<128x8xf32>
    %15 = arith.maximumf %14, %13 : vector<128x8xf32>
    %16 = vector.broadcast %cst_15 : f32 to vector<128x8xf32>
    %17 = arith.minimumf %16, %15 : vector<128x8xf32>
    %18 = vector.shape_cast %17 : vector<128x8xf32> to vector<8x16x8xf32>
    %c1 = arith.constant 1 : index
    %c1_16 = arith.constant 1 : index
    %c0_17 = arith.constant 0 : index
    %19 = vector.load %arg10[%c1, %c1_16, %c0_17] : memref<10x18x8xf32, #tpu.memory_space<vmem>>, vector<8x16x8xf32>
    tpu.vector_store %arg10[%c1, %c1_16, %c0_17], %18 {strides = array<i32>} : memref<10x18x8xf32, #tpu.memory_space<vmem>>, vector<8x16x8xf32>,
    %c1_i32 = arith.constant 1 : i32
    %20 = arith.subi %0, %c1_i32 : i32
    %c0_i32 = arith.constant 0 : i32
    %21 = arith.maxsi %20, %c0_i32 : i32
    %c8_i32_18 = arith.constant 8 : i32
    %22 = arith.addi %0, %c8_i32_18 : i32
    %c15_i32 = arith.constant 15 : i32
    %23 = arith.minsi %22, %c15_i32 : i32
    %c0_19 = arith.constant 0 : index
    %24 = arith.index_cast %21 : i32 to index
    %c0_20 = arith.constant 0 : index
    %c0_21 = arith.constant 0 : index
    %25 = vector.load %arg2[%c0_19, %24, %c0_20, %c0_21] : memref<1x16x16x4xf32, #tpu.memory_space<vmem>>, vector<1x1x16x4xf32>
    %c0_22 = arith.constant 0 : index
    %26 = arith.index_cast %23 : i32 to index
    %c0_23 = arith.constant 0 : index
    %c0_24 = arith.constant 0 : index
    %27 = vector.load %arg2[%c0_22, %26, %c0_23, %c0_24] : memref<1x16x16x4xf32, #tpu.memory_space<vmem>>, vector<1x1x16x4xf32>
    %28 = tpu.concatenate %25, %27 in 1 : vector<1x1x16x4xf32>, vector<1x1x16x4xf32> -> vector<1x2x16x4xf32>
    %29 = vector.shape_cast %28 : vector<1x2x16x4xf32> to vector<32x4xf32>
    %30 = arith.truncf %29 : vector<32x4xf32> to vector<32x4xbf16>
    %cst_25 = arith.constant dense<0.000000e+00> : vector<32x8xf32>
    %31 = tpu.matmul %30, %1, %cst_25 {dimension_numbers = #tpu.dot_dimension_numbers<[1], [0], [0], [1], [0, 0, 1, 1], [], []>} : vector<32x4xbf16>, vector<4x8xbf16>, vector<32x8xf32> -> vector<32x8xf32>
    %32 = vector.broadcast %2 : vector<1x8xf32> to vector<32x8xf32>
    %33 = arith.addf %31, %32 : vector<32x8xf32>
    %cst_26 = arith.constant 0.000000e+00 : f32
    %cst_27 = arith.constant 6.000000e+00 : f32
    %34 = vector.broadcast %cst_26 : f32 to vector<32x8xf32>
    %35 = arith.maximumf %34, %33 : vector<32x8xf32>
    %36 = vector.broadcast %cst_27 : f32 to vector<32x8xf32>
    %37 = arith.minimumf %36, %35 : vector<32x8xf32>
    %38 = vector.shape_cast %37 : vector<32x8xf32> to vector<2x16x8xf32>
    %39 = vector.extract_strided_slice %38 {offsets = [0, 0, 0], sizes = [1, 16, 8], strides = [1, 1, 1]} : vector<2x16x8xf32> to vector<1x16x8xf32>
    %c0_28 = arith.constant 0 : index
    %c1_29 = arith.constant 1 : index
    %c0_30 = arith.constant 0 : index
    %40 = vector.load %arg10[%c0_28, %c1_29, %c0_30] : memref<10x18x8xf32, #tpu.memory_space<vmem>>, vector<1x16x8xf32>
    tpu.vector_store %arg10[%c0_28, %c1_29, %c0_30], %39 {strides = array<i32>} : memref<10x18x8xf32, #tpu.memory_space<vmem>>, vector<1x16x8xf32>,
    %41 = vector.extract_strided_slice %38 {offsets = [1, 0, 0], sizes = [1, 16, 8], strides = [1, 1, 1]} : vector<2x16x8xf32> to vector<1x16x8xf32>
    %c9 = arith.constant 9 : index
    %c1_31 = arith.constant 1 : index
    %c0_32 = arith.constant 0 : index
    %42 = vector.load %arg10[%c9, %c1_31, %c0_32] : memref<10x18x8xf32, #tpu.memory_space<vmem>>, vector<1x16x8xf32>
    tpu.vector_store %arg10[%c9, %c1_31, %c0_32], %41 {strides = array<i32>} : memref<10x18x8xf32, #tpu.memory_space<vmem>>, vector<1x16x8xf32>,
    %c1_i32_33 = arith.constant 1 : i32
    %43 = arith.cmpi eq, %arg1, %c1_i32_33 : i32
    %44 = arith.extui %43 : i1 to i32
    %c0_i32_34 = arith.constant 0 : i32
    %45 = arith.cmpi ne, %44, %c0_i32_34 : i32
    scf.if %45 {
      %cst_62 = arith.constant 0.000000e+00 : f32
      %127 = vector.broadcast %cst_62 : f32 to vector<1x16x8xf32>
      %c9_63 = arith.constant 9 : index
      %c1_64 = arith.constant 1 : index
      %c0_65 = arith.constant 0 : index
      %128 = vector.load %arg10[%c9_63, %c1_64, %c0_65] : memref<10x18x8xf32, #tpu.memory_space<vmem>>, vector<1x16x8xf32>
      tpu.vector_store %arg10[%c9_63, %c1_64, %c0_65], %127 {strides = array<i32>} : memref<10x18x8xf32, #tpu.memory_space<vmem>>, vector<1x16x8xf32>,
    } else {
    }
    %c0_i32_35 = arith.constant 0 : i32
    %46 = arith.cmpi eq, %arg1, %c0_i32_35 : i32
    %47 = arith.extui %46 : i1 to i32
    %c0_i32_36 = arith.constant 0 : i32
    %48 = arith.cmpi ne, %47, %c0_i32_36 : i32
    scf.if %48 {
      %cst_62 = arith.constant 0.000000e+00 : f32
      %127 = vector.broadcast %cst_62 : f32 to vector<1x16x8xf32>
      %c0_63 = arith.constant 0 : index
      %c1_64 = arith.constant 1 : index
      %c0_65 = arith.constant 0 : index
      %128 = vector.load %arg10[%c0_63, %c1_64, %c0_65] : memref<10x18x8xf32, #tpu.memory_space<vmem>>, vector<1x16x8xf32>
      tpu.vector_store %arg10[%c0_63, %c1_64, %c0_65], %127 {strides = array<i32>} : memref<10x18x8xf32, #tpu.memory_space<vmem>>, vector<1x16x8xf32>,
    } else {
    }
    %cst_37 = arith.constant 0.000000e+00 : f32
    %49 = vector.broadcast %cst_37 : f32 to vector<10x1x8xf32>
    %c0_38 = arith.constant 0 : index
    %c0_39 = arith.constant 0 : index
    %c0_40 = arith.constant 0 : index
    %50 = vector.load %arg10[%c0_38, %c0_39, %c0_40] : memref<10x18x8xf32, #tpu.memory_space<vmem>>, vector<10x1x8xf32>
    tpu.vector_store %arg10[%c0_38, %c0_39, %c0_40], %49 {strides = array<i32>} : memref<10x18x8xf32, #tpu.memory_space<vmem>>, vector<10x1x8xf32>,
    %cst_41 = arith.constant 0.000000e+00 : f32
    %51 = vector.broadcast %cst_41 : f32 to vector<10x1x8xf32>
    %c0_42 = arith.constant 0 : index
    %c17 = arith.constant 17 : index
    %c0_43 = arith.constant 0 : index
    %52 = vector.load %arg10[%c0_42, %c17, %c0_43] : memref<10x18x8xf32, #tpu.memory_space<vmem>>, vector<10x1x8xf32>
    tpu.vector_store %arg10[%c0_42, %c17, %c0_43], %51 {strides = array<i32>} : memref<10x18x8xf32, #tpu.memory_space<vmem>>, vector<10x1x8xf32>,
    %c0_44 = arith.constant 0 : index
    %c0_45 = arith.constant 0 : index
    %c0_46 = arith.constant 0 : index
    %53 = vector.load %arg10[%c0_44, %c0_45, %c0_46] : memref<10x18x8xf32, #tpu.memory_space<vmem>>, vector<10x16x8xf32>
    %54 = vector.extract_strided_slice %53 {offsets = [0, 0, 0], sizes = [8, 16, 8], strides = [1, 1, 1]} : vector<10x16x8xf32> to vector<8x16x8xf32>
    %55 = vector.extract_strided_slice %3 {offsets = [0, 0], sizes = [1, 8], strides = [1, 1]} : vector<9x8xf32> to vector<1x8xf32>
    %56 = vector.shape_cast %55 : vector<1x8xf32> to vector<1x1x8xf32>
    %57 = vector.broadcast %56 : vector<1x1x8xf32> to vector<8x16x8xf32>
    %58 = arith.mulf %54, %57 : vector<8x16x8xf32>
    %59 = vector.extract_strided_slice %53 {offsets = [1, 0, 0], sizes = [8, 16, 8], strides = [1, 1, 1]} : vector<10x16x8xf32> to vector<8x16x8xf32>
    %60 = vector.extract_strided_slice %3 {offsets = [3, 0], sizes = [1, 8], strides = [1, 1]} : vector<9x8xf32> to vector<1x8xf32>
    %61 = vector.shape_cast %60 : vector<1x8xf32> to vector<1x1x8xf32>
    %62 = vector.broadcast %61 : vector<1x1x8xf32> to vector<8x16x8xf32>
    %63 = arith.mulf %59, %62 : vector<8x16x8xf32>
    %64 = arith.addf %58, %63 : vector<8x16x8xf32>
    %65 = vector.extract_strided_slice %53 {offsets = [2, 0, 0], sizes = [8, 16, 8], strides = [1, 1, 1]} : vector<10x16x8xf32> to vector<8x16x8xf32>
    %66 = vector.extract_strided_slice %3 {offsets = [6, 0], sizes = [1, 8], strides = [1, 1]} : vector<9x8xf32> to vector<1x8xf32>
    %67 = vector.shape_cast %66 : vector<1x8xf32> to vector<1x1x8xf32>
    %68 = vector.broadcast %67 : vector<1x1x8xf32> to vector<8x16x8xf32>
    %69 = arith.mulf %65, %68 : vector<8x16x8xf32>
    %70 = arith.addf %64, %69 : vector<8x16x8xf32>
    %c0_47 = arith.constant 0 : index
    %c1_48 = arith.constant 1 : index
    %c0_49 = arith.constant 0 : index
    %71 = vector.load %arg10[%c0_47, %c1_48, %c0_49] : memref<10x18x8xf32, #tpu.memory_space<vmem>>, vector<10x16x8xf32>
    %72 = vector.extract_strided_slice %71 {offsets = [0, 0, 0], sizes = [8, 16, 8], strides = [1, 1, 1]} : vector<10x16x8xf32> to vector<8x16x8xf32>
    %73 = vector.extract_strided_slice %3 {offsets = [1, 0], sizes = [1, 8], strides = [1, 1]} : vector<9x8xf32> to vector<1x8xf32>
    %74 = vector.shape_cast %73 : vector<1x8xf32> to vector<1x1x8xf32>
    %75 = vector.broadcast %74 : vector<1x1x8xf32> to vector<8x16x8xf32>
    %76 = arith.mulf %72, %75 : vector<8x16x8xf32>
    %77 = arith.addf %70, %76 : vector<8x16x8xf32>
    %78 = vector.extract_strided_slice %71 {offsets = [1, 0, 0], sizes = [8, 16, 8], strides = [1, 1, 1]} : vector<10x16x8xf32> to vector<8x16x8xf32>
    %79 = vector.extract_strided_slice %3 {offsets = [4, 0], sizes = [1, 8], strides = [1, 1]} : vector<9x8xf32> to vector<1x8xf32>
    %80 = vector.shape_cast %79 : vector<1x8xf32> to vector<1x1x8xf32>
    %81 = vector.broadcast %80 : vector<1x1x8xf32> to vector<8x16x8xf32>
    %82 = arith.mulf %78, %81 : vector<8x16x8xf32>
    %83 = arith.addf %77, %82 : vector<8x16x8xf32>
    %84 = vector.extract_strided_slice %71 {offsets = [2, 0, 0], sizes = [8, 16, 8], strides = [1, 1, 1]} : vector<10x16x8xf32> to vector<8x16x8xf32>
    %85 = vector.extract_strided_slice %3 {offsets = [7, 0], sizes = [1, 8], strides = [1, 1]} : vector<9x8xf32> to vector<1x8xf32>
    %86 = vector.shape_cast %85 : vector<1x8xf32> to vector<1x1x8xf32>
    %87 = vector.broadcast %86 : vector<1x1x8xf32> to vector<8x16x8xf32>
    %88 = arith.mulf %84, %87 : vector<8x16x8xf32>
    %89 = arith.addf %83, %88 : vector<8x16x8xf32>
    %c0_50 = arith.constant 0 : index
    %c2 = arith.constant 2 : index
    %c0_51 = arith.constant 0 : index
    %90 = vector.load %arg10[%c0_50, %c2, %c0_51] : memref<10x18x8xf32, #tpu.memory_space<vmem>>, vector<10x16x8xf32>
    %91 = vector.extract_strided_slice %90 {offsets = [0, 0, 0], sizes = [8, 16, 8], strides = [1, 1, 1]} : vector<10x16x8xf32> to vector<8x16x8xf32>
    %92 = vector.extract_strided_slice %3 {offsets = [2, 0], sizes = [1, 8], strides = [1, 1]} : vector<9x8xf32> to vector<1x8xf32>
    %93 = vector.shape_cast %92 : vector<1x8xf32> to vector<1x1x8xf32>
    %94 = vector.broadcast %93 : vector<1x1x8xf32> to vector<8x16x8xf32>
    %95 = arith.mulf %91, %94 : vector<8x16x8xf32>
    %96 = arith.addf %89, %95 : vector<8x16x8xf32>
    %97 = vector.extract_strided_slice %90 {offsets = [1, 0, 0], sizes = [8, 16, 8], strides = [1, 1, 1]} : vector<10x16x8xf32> to vector<8x16x8xf32>
    %98 = vector.extract_strided_slice %3 {offsets = [5, 0], sizes = [1, 8], strides = [1, 1]} : vector<9x8xf32> to vector<1x8xf32>
    %99 = vector.shape_cast %98 : vector<1x8xf32> to vector<1x1x8xf32>
    %100 = vector.broadcast %99 : vector<1x1x8xf32> to vector<8x16x8xf32>
    %101 = arith.mulf %97, %100 : vector<8x16x8xf32>
    %102 = arith.addf %96, %101 : vector<8x16x8xf32>
    %103 = vector.extract_strided_slice %90 {offsets = [2, 0, 0], sizes = [8, 16, 8], strides = [1, 1, 1]} : vector<10x16x8xf32> to vector<8x16x8xf32>
    %104 = vector.extract_strided_slice %3 {offsets = [8, 0], sizes = [1, 8], strides = [1, 1]} : vector<9x8xf32> to vector<1x8xf32>
    %105 = vector.shape_cast %104 : vector<1x8xf32> to vector<1x1x8xf32>
    %106 = vector.broadcast %105 : vector<1x1x8xf32> to vector<8x16x8xf32>
    %107 = arith.mulf %103, %106 : vector<8x16x8xf32>
    %108 = arith.addf %102, %107 : vector<8x16x8xf32>
    %109 = vector.shape_cast %4 : vector<1x8xf32> to vector<1x1x8xf32>
    %110 = vector.broadcast %109 : vector<1x1x8xf32> to vector<8x16x8xf32>
    %111 = arith.addf %108, %110 : vector<8x16x8xf32>
    %cst_52 = arith.constant 0.000000e+00 : f32
    %cst_53 = arith.constant 6.000000e+00 : f32
    %112 = vector.broadcast %cst_52 : f32 to vector<8x16x8xf32>
    %113 = arith.maximumf %112, %111 : vector<8x16x8xf32>
    %114 = vector.broadcast %cst_53 : f32 to vector<8x16x8xf32>
    %115 = arith.minimumf %114, %113 : vector<8x16x8xf32>
    %116 = vector.shape_cast %115 : vector<8x16x8xf32> to vector<128x8xf32>
    %117 = arith.truncf %116 : vector<128x8xf32> to vector<128x8xbf16>
    %cst_54 = arith.constant dense<0.000000e+00> : vector<128x4xf32>
    %118 = tpu.matmul %117, %5, %cst_54 {dimension_numbers = #tpu.dot_dimension_numbers<[1], [0], [0], [1], [0, 0, 1, 1], [], []>} : vector<128x8xbf16>, vector<8x4xbf16>, vector<128x4xf32> -> vector<128x4xf32>
    %119 = vector.broadcast %6 : vector<1x4xf32> to vector<128x4xf32>
    %120 = arith.addf %118, %119 : vector<128x4xf32>
    %c0_55 = arith.constant 0 : index
    %121 = arith.index_cast %0 : i32 to index
    %c0_56 = arith.constant 0 : index
    %c0_57 = arith.constant 0 : index
    %122 = vector.load %arg2[%c0_55, %121, %c0_56, %c0_57] : memref<1x16x16x4xf32, #tpu.memory_space<vmem>>, vector<1x8x16x4xf32>
    %123 = vector.shape_cast %122 : vector<1x8x16x4xf32> to vector<128x4xf32>
    %124 = arith.addf %120, %123 : vector<128x4xf32>
    %125 = vector.shape_cast %124 : vector<128x4xf32> to vector<1x8x16x4xf32>
    %c0_58 = arith.constant 0 : index
    %c0_59 = arith.constant 0 : index
    %c0_60 = arith.constant 0 : index
    %c0_61 = arith.constant 0 : index
    %126 = vector.load %arg9[%c0_58, %c0_59, %c0_60, %c0_61] : memref<1x8x16x4xf32, #tpu.memory_space<vmem>>, vector<1x8x16x4xf32>
    tpu.vector_store %arg9[%c0_58, %c0_59, %c0_60, %c0_61], %125 {strides = array<i32>} : memref<1x8x16x4xf32, #tpu.memory_space<vmem>>, vector<1x8x16x4xf32>,
    return
  }
  func.func @transform_0(%arg0: i32, %arg1: i32) -> (i32, i32, i32, i32) {
    %c0_i32 = arith.constant 0 : i32
    %c0_i32_0 = arith.constant 0 : i32
    %c0_i32_1 = arith.constant 0 : i32
    %c0_i32_2 = arith.constant 0 : i32
    return %arg0, %c0_i32, %c0_i32_0, %c0_i32_1 : i32, i32, i32, i32
  }
  func.func @transform_1(%arg0: i32, %arg1: i32) -> (i32, i32) {
    %c0_i32 = arith.constant 0 : i32
    %c0_i32_0 = arith.constant 0 : i32
    %c0_i32_1 = arith.constant 0 : i32
    return %c0_i32, %c0_i32_0 : i32, i32
  }
  func.func @transform_2(%arg0: i32, %arg1: i32) -> (i32, i32) {
    %c0_i32 = arith.constant 0 : i32
    %c0_i32_0 = arith.constant 0 : i32
    %c0_i32_1 = arith.constant 0 : i32
    return %c0_i32, %c0_i32_0 : i32, i32
  }
  func.func @transform_3(%arg0: i32, %arg1: i32) -> (i32, i32) {
    %c0_i32 = arith.constant 0 : i32
    %c0_i32_0 = arith.constant 0 : i32
    %c0_i32_1 = arith.constant 0 : i32
    return %c0_i32, %c0_i32_0 : i32, i32
  }
  func.func @transform_4(%arg0: i32, %arg1: i32) -> (i32, i32) {
    %c0_i32 = arith.constant 0 : i32
    %c0_i32_0 = arith.constant 0 : i32
    %c0_i32_1 = arith.constant 0 : i32
    return %c0_i32, %c0_i32_0 : i32, i32
  }
  func.func @transform_5(%arg0: i32, %arg1: i32) -> (i32, i32) {
    %c0_i32 = arith.constant 0 : i32
    %c0_i32_0 = arith.constant 0 : i32
    %c0_i32_1 = arith.constant 0 : i32
    return %c0_i32, %c0_i32_0 : i32, i32
  }
  func.func @transform_6(%arg0: i32, %arg1: i32) -> (i32, i32) {
    %c0_i32 = arith.constant 0 : i32
    %c0_i32_0 = arith.constant 0 : i32
    %c0_i32_1 = arith.constant 0 : i32
    return %c0_i32, %c0_i32_0 : i32, i32
  }
  func.func @transform_7(%arg0: i32, %arg1: i32) -> (i32, i32, i32, i32) {
    %c0_i32 = arith.constant 0 : i32
    %c0_i32_0 = arith.constant 0 : i32
    %c0_i32_1 = arith.constant 0 : i32
    return %arg0, %arg1, %c0_i32, %c0_i32_0 : i32, i32, i32, i32
  }
}

</mosaic_0001>

<llo_original>
// kernel: tpu_custom_call.1
$region0: #{tpu_custom_call.1}
  #allocation0 [shape = 'u32[]', space=smem, size = 0x4, offset = 0x4, fixed_abs, tag = 'smem constant byte address 0x4 - core index']
  #allocation1 [shape = 'u32[144,128]{1,0:T(1,128)}', space=vmem, size = 0x12000, scoped, tag = 'internal scratch']
  #allocation2 [shape = 'f32[10,18,8]{2,1,0:T(8,128)}', space=vmem, size = 0x1e000, scoped, tag = 'scratch operand']
  %s0 = inlined_call_operand.vmem [shape: f32[2,16,16,4], index: 0, kind: input, shape index: {}]
  %s1 = inlined_call_operand.vmem [shape: bf16[4,8], index: 1, kind: input, shape index: {}]
  %s2 = inlined_call_operand.vmem [shape: f32[1,8], index: 2, kind: input, shape index: {}]
  %s3 = inlined_call_operand.vmem [shape: f32[9,8], index: 3, kind: input, shape index: {}]
  %s4 = inlined_call_operand.vmem [shape: f32[1,8], index: 4, kind: input, shape index: {}]
  %s5 = inlined_call_operand.vmem [shape: bf16[8,4], index: 5, kind: input, shape index: {}]
  %s6 = inlined_call_operand.vmem [shape: f32[1,4], index: 6, kind: input, shape index: {}]
  %s7 = inlined_call_operand.vmem [shape: f32[2,16,16,4], index: 7, kind: output, shape index: {}]
  %s8 = sld [smem:[#allocation0]]
  $region69: #{tpu_custom_call.1} parent=0
    _
  %s10 = ssub.s32 1, %s8
  %s11 = scalar_select 0, %s10, %s8
  loop: start=0, step=1, limit=6
  $region2: #{tpu_custom_call.1} parent=0 // loop_pre_header
    _
  $region3: #{tpu_custom_call.1} parent=0 // loop_header
    %s13 = sphi 0, %s17
    %p14 = scmp.ge.s32.totalorder %s13, 6
    %s20 = sphi 0, %s32
    %s21 = sphi 0, %s28
    %s22 = sphi 0, %s20
    %s23 = sphi 0, %s21
    %s24 = sphi 0, %s22
    %s25 = sphi 0, %s23
    %s35 = sphi 0, %s37
    %s38 = sphi 0, %s35
    %s39 = sphi 0, %s38
    %s55 = sphi 0, %s39
    %s59 = sphi 0, %s59
    %s61 = sphi 0, %s59
    %s62 = sphi 0, %s61
    %s76 = sphi 0, %s62
    %s80 = sphi 0, %s80
    %s82 = sphi 0, %s80
    %s83 = sphi 0, %s82
    %s97 = sphi 0, %s83
    %s101 = sphi 0, %s101
    %s103 = sphi 0, %s101
    %s104 = sphi 0, %s103
    %s118 = sphi 0, %s104
    %s122 = sphi 0, %s122
    %s124 = sphi 0, %s122
    %s125 = sphi 0, %s124
    %s139 = sphi 0, %s125
    %s143 = sphi 0, %s143
    %s145 = sphi 0, %s143
    %s146 = sphi 0, %s145
    %s160 = sphi 0, %s146
    %s164 = sphi 0, %s164
    %s166 = sphi 0, %s164
    %s167 = sphi 0, %s166
    %s181 = sphi 0, %s167
    %s189 = sphi 0, %s191
    %s192 = sphi 0, %s189
    %s193 = sphi 0, %s192
    %s209 = sphi 0, %s193
  $region4: #{tpu_custom_call.1} parent=0 // loop_header_branch
    %16 = sbr.rel (%p14) target = $region8
  $region5: #{tpu_custom_call.1} parent=0 // loop_body
    %s18 = ssub.s32 %s13, 1
    %s19 = ssub.s32 %s13, 2
    %s26 = sadd.s32 1, %s21
    %p27 = scmp.ge.s32.totalorder %s26, 2
    %s28 = scalar_select %p27, 0, %s26
    %s29 = sadd.s32 1, %s20
    %s30 = scalar_select %p27, %s29, %s20
    %p31 = scmp.ge.s32.totalorder %s30, 2
    %s32 = scalar_select %p31, 0, %s30
    %s33 = ssub.s32 %s20, %s32
    %p34 = scmp.eq.s32.totalorder %s33, 0
    %s36 = sadd.s32 %s35, 1
    %s37 = scalar_select %p34, %s35, %s36
    %p40 = pneg %p34
    %p41 = scmp.eq.s32.totalorder %s13, 3
    %p42 = por %p40, %p41
    %p43 = scmp.ne.s32.totalorder %s35, %s38
    %p44 = scmp.eq.s32.totalorder %s13, 0
    %p45 = por %p43, %p44
    %p46 = scmp.ne.s32.totalorder %s35, %s38
    %p47 = scmp.eq.s32.totalorder %s18, 3
    %p48 = por %p46, %p47
    %p49 = scmp.ne.s32.totalorder %s38, %s39
    %p50 = scmp.eq.s32.totalorder %s18, 0
    %p51 = por %p49, %p50
    %p52 = scmp.ne.s32.totalorder %s38, %s39
    %p53 = scmp.eq.s32.totalorder %s19, 3
    %p54 = por %p52, %p53
    %p56 = scmp.ne.s32.totalorder %s39, %s55
    %p57 = scmp.eq.s32.totalorder %s19, 0
    %p58 = por %p56, %p57
    %s60 = sadd.s32 %s59, 1
    %p63 = scmp.eq.s32.totalorder %s13, 3
    %p64 = scmp.ne.s32.totalorder %s59, %s61
    %p65 = scmp.eq.s32.totalorder %s13, 0
    %p66 = por %p64, %p65
    %p67 = scmp.ne.s32.totalorder %s59, %s61
    %p68 = scmp.eq.s32.totalorder %s18, 3
    %p69 = por %p67, %p68
    %p70 = scmp.ne.s32.totalorder %s61, %s62
    %p71 = scmp.eq.s32.totalorder %s18, 0
    %p72 = por %p70, %p71
    %p73 = scmp.ne.s32.totalorder %s61, %s62
    %p74 = scmp.eq.s32.totalorder %s19, 3
    %p75 = por %p73, %p74
    %p77 = scmp.ne.s32.totalorder %s62, %s76
    %p78 = scmp.eq.s32.totalorder %s19, 0
    %p79 = por %p77, %p78
    %s81 = sadd.s32 %s80, 1
    %p84 = scmp.eq.s32.totalorder %s13, 3
    %p85 = scmp.ne.s32.totalorder %s80, %s82
    %p86 = scmp.eq.s32.totalorder %s13, 0
    %p87 = por %p85, %p86
    %p88 = scmp.ne.s32.totalorder %s80, %s82
    %p89 = scmp.eq.s32.totalorder %s18, 3
    %p90 = por %p88, %p89
    %p91 = scmp.ne.s32.totalorder %s82, %s83
    %p92 = scmp.eq.s32.totalorder %s18, 0
    %p93 = por %p91, %p92
    %p94 = scmp.ne.s32.totalorder %s82, %s83
    %p95 = scmp.eq.s32.totalorder %s19, 3
    %p96 = por %p94, %p95
    %p98 = scmp.ne.s32.totalorder %s83, %s97
    %p99 = scmp.eq.s32.totalorder %s19, 0
    %p100 = por %p98, %p99
    %s102 = sadd.s32 %s101, 1
    %p105 = scmp.eq.s32.totalorder %s13, 3
    %p106 = scmp.ne.s32.totalorder %s101, %s103
    %p107 = scmp.eq.s32.totalorder %s13, 0
    %p108 = por %p106, %p107
    %p109 = scmp.ne.s32.totalorder %s101, %s103
    %p110 = scmp.eq.s32.totalorder %s18, 3
    %p111 = por %p109, %p110
    %p112 = scmp.ne.s32.totalorder %s103, %s104
    %p113 = scmp.eq.s32.totalorder %s18, 0
    %p114 = por %p112, %p113
    %p115 = scmp.ne.s32.totalorder %s103, %s104
    %p116 = scmp.eq.s32.totalorder %s19, 3
    %p117 = por %p115, %p116
    %p119 = scmp.ne.s32.totalorder %s104, %s118
    %p120 = scmp.eq.s32.totalorder %s19, 0
    %p121 = por %p119, %p120
    %s123 = sadd.s32 %s122, 1
    %p126 = scmp.eq.s32.totalorder %s13, 3
    %p127 = scmp.ne.s32.totalorder %s122, %s124
    %p128 = scmp.eq.s32.totalorder %s13, 0
    %p129 = por %p127, %p128
    %p130 = scmp.ne.s32.totalorder %s122, %s124
    %p131 = scmp.eq.s32.totalorder %s18, 3
    %p132 = por %p130, %p131
    %p133 = scmp.ne.s32.totalorder %s124, %s125
    %p134 = scmp.eq.s32.totalorder %s18, 0
    %p135 = por %p133, %p134
    %p136 = scmp.ne.s32.totalorder %s124, %s125
    %p137 = scmp.eq.s32.totalorder %s19, 3
    %p138 = por %p136, %p137
    %p140 = scmp.ne.s32.totalorder %s125, %s139
    %p141 = scmp.eq.s32.totalorder %s19, 0
    %p142 = por %p140, %p141
    %s144 = sadd.s32 %s143, 1
    %p147 = scmp.eq.s32.totalorder %s13, 3
    %p148 = scmp.ne.s32.totalorder %s143, %s145
    %p149 = scmp.eq.s32.totalorder %s13, 0
    %p150 = por %p148, %p149
    %p151 = scmp.ne.s32.totalorder %s143, %s145
    %p152 = scmp.eq.s32.totalorder %s18, 3
    %p153 = por %p151, %p152
    %p154 = scmp.ne.s32.totalorder %s145, %s146
    %p155 = scmp.eq.s32.totalorder %s18, 0
    %p156 = por %p154, %p155
    %p157 = scmp.ne.s32.totalorder %s145, %s146
    %p158 = scmp.eq.s32.totalorder %s19, 3
    %p159 = por %p157, %p158
    %p161 = scmp.ne.s32.totalorder %s146, %s160
    %p162 = scmp.eq.s32.totalorder %s19, 0
    %p163 = por %p161, %p162
    %s165 = sadd.s32 %s164, 1
    %p168 = scmp.eq.s32.totalorder %s13, 3
    %p169 = scmp.ne.s32.totalorder %s164, %s166
    %p170 = scmp.eq.s32.totalorder %s13, 0
    %p171 = por %p169, %p170
    %p172 = scmp.ne.s32.totalorder %s164, %s166
    %p173 = scmp.eq.s32.totalorder %s18, 3
    %p174 = por %p172, %p173
    %p175 = scmp.ne.s32.totalorder %s166, %s167
    %p176 = scmp.eq.s32.totalorder %s18, 0
    %p177 = por %p175, %p176
    %p178 = scmp.ne.s32.totalorder %s166, %s167
    %p179 = scmp.eq.s32.totalorder %s19, 3
    %p180 = por %p178, %p179
    %p182 = scmp.ne.s32.totalorder %s167, %s181
    %p183 = scmp.eq.s32.totalorder %s19, 0
    %p184 = por %p182, %p183
    %s185 = ssub.s32 %s20, %s32
    %s186 = ssub.s32 %s21, %s28
    %s187 = sor.u32 %s185, %s186
    %p188 = scmp.eq.s32.totalorder %s187, 0
    %s190 = sadd.s32 %s189, 1
    %s191 = scalar_select %p188, %s189, %s190
    %p194 = pneg %p188
    %p195 = scmp.eq.s32.totalorder %s13, 3
    %p196 = por %p194, %p195
    %p197 = scmp.ne.s32.totalorder %s189, %s192
    %p198 = scmp.eq.s32.totalorder %s13, 0
    %p199 = por %p197, %p198
    %p200 = scmp.ne.s32.totalorder %s189, %s192
    %p201 = scmp.eq.s32.totalorder %s18, 3
    %p202 = por %p200, %p201
    %p203 = scmp.ne.s32.totalorder %s192, %s193
    %p204 = scmp.eq.s32.totalorder %s18, 0
    %p205 = por %p203, %p204
    %p206 = scmp.ne.s32.totalorder %s192, %s193
    %p207 = scmp.eq.s32.totalorder %s19, 3
    %p208 = por %p206, %p207
    %p210 = scmp.ne.s32.totalorder %s193, %s209
    %p211 = scmp.eq.s32.totalorder %s19, 0
    %p212 = por %p210, %p211
    %p213 = scmp.le.s32.totalorder 1, %s13
    %p214 = scmp.lt.s32.totalorder %s13, 5
    %p215 = pnand %p213, %p214
    %p216 = pneg %p215
    // Predicated region
    $region9: #{tpu_custom_call.1} parent=5 // pred_check
      _
    $region10: #{tpu_custom_call.1} parent=5 // pred_check_branch
      %218 = sbr.rel (%p215) target = $region12
    $region11: #{tpu_custom_call.1} parent=5 // pred_region
      %s219 = ssub.s32 %s13, 1
      // Predicated region
      $region13: #{tpu_custom_call.1} parent=11 // pred_check
        %p220 = pneg %p72
      $region14: #{tpu_custom_call.1} parent=11 // pred_check_branch
        %222 = sbr.rel (%p220) target = $region16
      $region15: #{tpu_custom_call.1} parent=11 // pred_region
        _
      $region16: #{tpu_custom_call.1} parent=11 // pred_fallthru
        _
      // Predicated region
      $region17: #{tpu_custom_call.1} parent=11 // pred_check
        %p223 = pneg %p93
      $region18: #{tpu_custom_call.1} parent=11 // pred_check_branch
        %225 = sbr.rel (%p223) target = $region20
      $region19: #{tpu_custom_call.1} parent=11 // pred_region
        _
      $region20: #{tpu_custom_call.1} parent=11 // pred_fallthru
        _
      // Predicated region
      $region21: #{tpu_custom_call.1} parent=11 // pred_check
        %p226 = pneg %p114
      $region22: #{tpu_custom_call.1} parent=11 // pred_check_branch
        %228 = sbr.rel (%p226) target = $region24
      $region23: #{tpu_custom_call.1} parent=11 // pred_region
        _
      $region24: #{tpu_custom_call.1} parent=11 // pred_fallthru
        _
      // Predicated region
      $region25: #{tpu_custom_call.1} parent=11 // pred_check
        %p229 = pneg %p135
      $region26: #{tpu_custom_call.1} parent=11 // pred_check_branch
        %231 = sbr.rel (%p229) target = $region28
      $region27: #{tpu_custom_call.1} parent=11 // pred_region
        _
      $region28: #{tpu_custom_call.1} parent=11 // pred_fallthru
        _
      // Predicated region
      $region29: #{tpu_custom_call.1} parent=11 // pred_check
        %p232 = pneg %p156
      $region30: #{tpu_custom_call.1} parent=11 // pred_check_branch
        %234 = sbr.rel (%p232) target = $region32
      $region31: #{tpu_custom_call.1} parent=11 // pred_region
        _
      $region32: #{tpu_custom_call.1} parent=11 // pred_fallthru
        _
      // Predicated region
      $region33: #{tpu_custom_call.1} parent=11 // pred_check
        %p235 = pneg %p177
      $region34: #{tpu_custom_call.1} parent=11 // pred_check_branch
        %237 = sbr.rel (%p235) target = $region36
      $region35: #{tpu_custom_call.1} parent=11 // pred_region
        _
      $region36: #{tpu_custom_call.1} parent=11 // pred_fallthru
        _
    $region12: #{tpu_custom_call.1} parent=5 // pred_fallthru
      _
    %p238 = scmp.lt.s32.totalorder %s13, 4
    // Predicated region
    $region37: #{tpu_custom_call.1} parent=5 // pred_check
      %p239 = pneg %p238
    $region38: #{tpu_custom_call.1} parent=5 // pred_check_branch
      %241 = sbr.rel (%p239) target = $region40
    $region39: #{tpu_custom_call.1} parent=5 // pred_region
      // Predicated region
      $region41: #{tpu_custom_call.1} parent=39 // pred_check
        %p242 = pneg %p45
      $region42: #{tpu_custom_call.1} parent=39 // pred_check_branch
        %244 = sbr.rel (%p242) target = $region44
      $region43: #{tpu_custom_call.1} parent=39 // pred_region
        %p245 = scmp.lt.s32.totalorder %s20, 1
        %s246 = scalar_select %p245, %s20, 1
        %s247 = smul.addr %s246, 32
        %s248 = smul.addr %s247, 8
        %s249 = scalar_lea.vmem %s0, %s248
      $region44: #{tpu_custom_call.1} parent=39 // pred_fallthru
        _
    $region40: #{tpu_custom_call.1} parent=5 // pred_fallthru
      _
    %p250 = scmp.le.s32.totalorder 1, %s13
    %p251 = scmp.lt.s32.totalorder %s13, 5
    %p252 = pnand %p250, %p251
    %p253 = pneg %p252
    // Predicated region
    $region45: #{tpu_custom_call.1} parent=5 // pred_check
      _
    $region46: #{tpu_custom_call.1} parent=5 // pred_check_branch
      %255 = sbr.rel (%p252) target = $region48
    $region47: #{tpu_custom_call.1} parent=5 // pred_region
      %s256 = ssub.s32 %s13, 1
      %p257 = scmp.lt.s32.totalorder %s22, 1
      %s258 = scalar_select %p257, %s22, 1
      %s259 = smul.addr %s258, 32
      %s260 = smul.addr %s259, 8
      %s261 = scalar_lea.vmem %s0, %s260
      %p262 = pneg %p51
      %p263 = pneg %p48
      %p264 = pneg %p72
      %p265 = pneg %p69
      %p266 = pneg %p93
      %p267 = pneg %p90
      %p268 = pneg %p114
      %p269 = pneg %p111
      %p270 = pneg %p135
      %p271 = pneg %p132
      %p272 = pneg %p156
      %p273 = pneg %p153
      %p274 = pneg %p177
      %p275 = pneg %p174
      %p276 = pneg %p205
      %p277 = pneg %p202
      %s278 = smul.u32 8, %s23
      %p279 = scmp.lt.s32.totalorder %s22, 1
      %s280 = scalar_select %p279, %s22, 1
      %p281 = scmp.lt.s32.totalorder %s278, 15
      %s282 = scalar_select %p281, %s278, 15
      %s283 = smul.addr %s282, 2
      %s284 = smul.addr %s280, 32
      %s285 = sadd.s32 %s283, %s284
      %s286 = smul.addr %s285, 8
      %s287 = scalar_lea.vmem %s7, %s286
      %p288 = scmp.lt.s32.totalorder %s22, 1
      %s289 = scalar_select %p288, %s22, 1
      %s290 = smul.addr %s289, 32
      %s291 = smul.addr %s290, 8
      %s292 = scalar_lea.vmem %s0, %s291
      %s293 = smul.u32 8, %s23
      %p294 = scmp.lt.s32.totalorder %s22, 1
      %s295 = scalar_select %p294, %s22, 1
      %p296 = scmp.lt.s32.totalorder %s293, 15
      %s297 = scalar_select %p296, %s293, 15
      %s298 = smul.addr %s297, 2
      %s299 = smul.addr %s295, 32
      %s300 = sadd.s32 %s298, %s299
      %s301 = smul.addr %s300, 8
      %s302 = scalar_lea.vmem %s7, %s301
      %s303 = smul.u32 8, %s23
      %s305 = smul.u32 %s23, 8
      %v306 = vld [vmem:[%s1] sm:$0x3]
      %v307 = vld [vmem:[%s2] sm:$0x1]
      %v308 = vld [vmem:[%s3] sm:$0xff]
      %v309 = vld [vmem:[%s3 + $0x8] sm:$0x1]
      %v310 = vld [vmem:[%s4] sm:$0x1]
      %v311 = vld [vmem:[%s5] sm:$0xf]
      %v312 = vld [vmem:[%s6] sm:$0x1]
      %s313 = smul.u32 %s305, 16
      %s314 = scalar_lea.vmem %s292, %s313
      %v315 = vld [vmem:[%s314] sm:$0xff]
      %v316 = vld [vmem:[%s314 + $0x8] sm:$0xff]
      %v317 = vld [vmem:[%s314 + $0x10] sm:$0xff]
      %v318 = vld [vmem:[%s314 + $0x18] sm:$0xff]
      %v319 = vld [vmem:[%s314 + $0x20] sm:$0xff]
      %v320 = vld [vmem:[%s314 + $0x28] sm:$0xff]
      %v321 = vld [vmem:[%s314 + $0x30] sm:$0xff]
      %v322 = vld [vmem:[%s314 + $0x38] sm:$0xff]
      %v323 = vld [vmem:[%s314 + $0x40] sm:$0xff]
      %v324 = vld [vmem:[%s314 + $0x48] sm:$0xff]
      %v325 = vld [vmem:[%s314 + $0x50] sm:$0xff]
      %v326 = vld [vmem:[%s314 + $0x58] sm:$0xff]
      %v327 = vld [vmem:[%s314 + $0x60] sm:$0xff]
      %v328 = vld [vmem:[%s314 + $0x68] sm:$0xff]
      %v329 = vld [vmem:[%s314 + $0x70] sm:$0xff]
      %v330 = vld [vmem:[%s314 + $0x78] sm:$0xff]
      %v331 = vpack.c.bf16 %v316, %v315
      %v332 = vpack.c.bf16 %v318, %v317
      %v333 = vpack.c.bf16 %v320, %v319
      %v334 = vpack.c.bf16 %v322, %v321
      %v335 = vpack.c.bf16 %v324, %v323
      %v336 = vpack.c.bf16 %v326, %v325
      %v337 = vpack.c.bf16 %v328, %v327
      %v338 = vpack.c.bf16 %v330, %v329
      %v340 = vlaneseq
      %v341 = vshrl.u32 %v340, 7
      %v342 = vsub.s32 0, %v341
      %v343 = vrot.slane %v307, %v342
      %vm345 = vcmask 31744
      %v347 = vsel %vm345, %v331, 0
      %v350 = vsel %vm345, %v332, 0
      %v353 = vsel %vm345, %v333, 0
      %v356 = vsel %vm345, %v334, 0
      %v359 = vsel %vm345, %v335, 0
      %v362 = vsel %vm345, %v336, 0
      %v365 = vsel %vm345, %v337, 0
      %v368 = vsel %vm345, %v338, 0
      %vm370 = vcmask 1041408
      %v372 = vsel %vm370, %v306, 0
      %374 = vmatprep.subr.bf16.mxu0 0
      %375 = vmatpush1.bf16.msra.mxu0 %v372
      %376 = vmatprep.subr.bf16.mxu0 0
      %377 = vmatpush1.bf16.msra.mxu0 0
      %378 = vmatprep.subr.bf16.mxu0 0
      %379 = vmatpush1.bf16.msra.mxu0 0
      %380 = vmatprep.subr.bf16.mxu0 0
      %381 = vmatpush1.bf16.msra.mxu0 0
      %382 = vmatprep.subr.bf16.mxu0 0
      %383 = vmatpush1.bf16.msra.mxu0 0
      %384 = vmatprep.subr.bf16.mxu0 0
      %385 = vmatpush1.bf16.msra.mxu0 0
      %386 = vmatprep.subr.bf16.mxu0 0
      %387 = vmatpush1.bf16.msra.mxu0 0
      %388 = vmatprep.subr.bf16.mxu0 0
      %389 = vmatpush1.bf16.msra.mxu0 0
      %390 = vmatprep.subr.bf16.mxu0 0
      %391 = vmatpush1.bf16.msra.mxu0 0
      %392 = vmatprep.subr.bf16.mxu0 0
      %393 = vmatpush1.bf16.msra.mxu0 0
      %394 = vmatprep.subr.bf16.mxu0 0
      %395 = vmatpush1.bf16.msra.mxu0 0
      %396 = vmatprep.subr.bf16.mxu0 0
      %397 = vmatpush1.bf16.msra.mxu0 0
      %398 = vmatprep.subr.bf16.mxu0 0
      %399 = vmatpush1.bf16.msra.mxu0 0
      %400 = vmatprep.subr.bf16.mxu0 0
      %401 = vmatpush1.bf16.msra.mxu0 0
      %402 = vmatprep.subr.bf16.mxu0 0
      %403 = vmatpush1.bf16.msra.mxu0 0
      %404 = vmatprep.subr.bf16.mxu0 0
      %405 = vmatpush1.bf16.msra.mxu0 0
      %406 = vmatprep.mubr.bf16.mxu0 0
      %407 = vmatmul.mubr.bf16.gmra.mrb[0].mxu0 %v347
      %v408 = vpop.f32.mrb[0].mxu0
      %v409 = vadd.f32 %v343, %v408
      %v410 = vpop.f32.mrb[0].mxu0
      %v411 = vpop.f32.mrb[0].mxu0
      %v412 = vadd.f32 %v343, %v411
      %v413 = vpop.f32.mrb[0].mxu0
      %414 = vmatprep.mubr.bf16.mxu0 0
      %415 = vmatmul.mubr.bf16.gmra.mrb[0].mxu0 %v350
      %v416 = vpop.f32.mrb[0].mxu0
      %v417 = vadd.f32 %v343, %v416
      %v418 = vpop.f32.mrb[0].mxu0
      %v419 = vpop.f32.mrb[0].mxu0
      %v420 = vadd.f32 %v343, %v419
      %v421 = vpop.f32.mrb[0].mxu0
      %422 = vmatprep.mubr.bf16.mxu0 0
      %423 = vmatmul.mubr.bf16.gmra.mrb[0].mxu0 %v353
      %v424 = vpop.f32.mrb[0].mxu0
      %v425 = vadd.f32 %v343, %v424
      %v426 = vpop.f32.mrb[0].mxu0
      %v427 = vpop.f32.mrb[0].mxu0
      %v428 = vadd.f32 %v343, %v427
      %v429 = vpop.f32.mrb[0].mxu0
      %430 = vmatprep.mubr.bf16.mxu0 0
      %431 = vmatmul.mubr.bf16.gmra.mrb[0].mxu0 %v356
      %v432 = vpop.f32.mrb[0].mxu0
      %v433 = vadd.f32 %v343, %v432
      %v434 = vpop.f32.mrb[0].mxu0
      %v435 = vpop.f32.mrb[0].mxu0
      %v436 = vadd.f32 %v343, %v435
      %v437 = vpop.f32.mrb[0].mxu0
      %438 = vmatprep.mubr.bf16.mxu0 0
      %439 = vmatmul.mubr.bf16.gmra.mrb[0].mxu0 %v359
      %v440 = vpop.f32.mrb[0].mxu0
      %v441 = vadd.f32 %v343, %v440
      %v442 = vpop.f32.mrb[0].mxu0
      %v443 = vpop.f32.mrb[0].mxu0
      %v444 = vadd.f32 %v343, %v443
      %v445 = vpop.f32.mrb[0].mxu0
      %446 = vmatprep.mubr.bf16.mxu0 0
      %447 = vmatmul.mubr.bf16.gmra.mrb[0].mxu0 %v362
      %v448 = vpop.f32.mrb[0].mxu0
      %v449 = vadd.f32 %v343, %v448
      %v450 = vpop.f32.mrb[0].mxu0
      %v451 = vpop.f32.mrb[0].mxu0
      %v452 = vadd.f32 %v343, %v451
      %v453 = vpop.f32.mrb[0].mxu0
      %454 = vmatprep.mubr.bf16.mxu0 0
      %455 = vmatmul.mubr.bf16.gmra.mrb[0].mxu0 %v365
      %v456 = vpop.f32.mrb[0].mxu0
      %v457 = vadd.f32 %v343, %v456
      %v458 = vpop.f32.mrb[0].mxu0
      %v459 = vpop.f32.mrb[0].mxu0
      %v460 = vadd.f32 %v343, %v459
      %v461 = vpop.f32.mrb[0].mxu0
      %462 = vmatprep.mubr.bf16.mxu0 0
      %463 = vmatmul.mubr.bf16.gmra.mrb[0].mxu0 %v368
      %v464 = vpop.f32.mrb[0].mxu0
      %v465 = vadd.f32 %v343, %v464
      %v466 = vpop.f32.mrb[0].mxu0
      %v467 = vpop.f32.mrb[0].mxu0
      %v468 = vadd.f32 %v343, %v467
      %v469 = vpop.f32.mrb[0].mxu0
      %470 = vdwg.mxu0
      %v471 = vmax.f32 %v409, 0.0
      %v472 = vmax.f32 %v412, 0.0
      %v473 = vmax.f32 %v417, 0.0
      %v474 = vmax.f32 %v420, 0.0
      %v475 = vmax.f32 %v425, 0.0
      %v476 = vmax.f32 %v428, 0.0
      %v477 = vmax.f32 %v433, 0.0
      %v478 = vmax.f32 %v436, 0.0
      %v479 = vmax.f32 %v441, 0.0
      %v480 = vmax.f32 %v444, 0.0
      %v481 = vmax.f32 %v449, 0.0
      %v482 = vmax.f32 %v452, 0.0
      %v483 = vmax.f32 %v457, 0.0
      %v484 = vmax.f32 %v460, 0.0
      %v485 = vmax.f32 %v465, 0.0
      %v486 = vmax.f32 %v468, 0.0
      %v487 = vmin.f32 %v471, 6.0
      %v488 = vmin.f32 %v472, 6.0
      %v489 = vmin.f32 %v473, 6.0
      %v490 = vmin.f32 %v474, 6.0
      %v491 = vmin.f32 %v475, 6.0
      %v492 = vmin.f32 %v476, 6.0
      %v493 = vmin.f32 %v477, 6.0
      %v494 = vmin.f32 %v478, 6.0
      %v495 = vmin.f32 %v479, 6.0
      %v496 = vmin.f32 %v480, 6.0
      %v497 = vmin.f32 %v481, 6.0
      %v498 = vmin.f32 %v482, 6.0
      %v499 = vmin.f32 %v483, 6.0
      %v500 = vmin.f32 %v484, 6.0
      %v501 = vmin.f32 %v485, 6.0
      %v502 = vmin.f32 %v486, 6.0
      %s503 = scalar_lea.vmem [#allocation2], 24
      %vm504 = vcmask 64512
      %505 = vst.msk [vmem:[%s503 + $0x1] sm:$0xff] %vm504, %v487
      %506 = vst.msk [vmem:[%s503 + $0x9] sm:$0xff] %vm504, %v488
      %507 = vst.msk [vmem:[%s503 + $0x19] sm:$0xff] %vm504, %v489
      %508 = vst.msk [vmem:[%s503 + $0x21] sm:$0xff] %vm504, %v490
      %509 = vst.msk [vmem:[%s503 + $0x31] sm:$0xff] %vm504, %v491
      %510 = vst.msk [vmem:[%s503 + $0x39] sm:$0xff] %vm504, %v492
      %511 = vst.msk [vmem:[%s503 + $0x49] sm:$0xff] %vm504, %v493
      %512 = vst.msk [vmem:[%s503 + $0x51] sm:$0xff] %vm504, %v494
      %513 = vst.msk [vmem:[%s503 + $0x61] sm:$0xff] %vm504, %v495
      %514 = vst.msk [vmem:[%s503 + $0x69] sm:$0xff] %vm504, %v496
      %515 = vst.msk [vmem:[%s503 + $0x79] sm:$0xff] %vm504, %v497
      %516 = vst.msk [vmem:[%s503 + $0x81] sm:$0xff] %vm504, %v498
      %517 = vst.msk [vmem:[%s503 + $0x91] sm:$0xff] %vm504, %v499
      %518 = vst.msk [vmem:[%s503 + $0x99] sm:$0xff] %vm504, %v500
      %519 = vst.msk [vmem:[%s503 + $0xa9] sm:$0xff] %vm504, %v501
      %520 = vst.msk [vmem:[%s503 + $0xb1] sm:$0xff] %vm504, %v502
      %s521 = ssub.s32 %s305, 1
      %p522 = scmp.gt.s32.totalorder %s521, 0
      %s523 = scalar_select %p522, %s521, 0
      %s524 = sadd.s32 %s305, 8
      %p525 = scmp.lt.s32.totalorder %s524, 15
      %s526 = scalar_select %p525, %s524, 15
      %s527 = smul.u32 %s523, 16
      %s528 = scalar_lea.vmem %s292, %s527
      %v529 = vld [vmem:[%s528] sm:$0xff]
      %v530 = vld [vmem:[%s528 + $0x8] sm:$0xff]
      %s531 = smul.u32 %s526, 16
      %s532 = scalar_lea.vmem %s292, %s531
      %v533 = vld [vmem:[%s532] sm:$0xff]
      %v534 = vld [vmem:[%s532 + $0x8] sm:$0xff]
      %v535 = vpack.c.bf16 %v530, %v529
      %v536 = vpack.c.bf16 %v534, %v533
      %v538 = vsel %vm345, %v535, 0
      %v541 = vsel %vm345, %v536, 0
      %543 = vmatprep.subr.bf16.mxu0 0
      %544 = vmatpush1.bf16.msra.mxu0 %v372
      %545 = vmatprep.subr.bf16.mxu0 0
      %546 = vmatpush1.bf16.msra.mxu0 0
      %547 = vmatprep.subr.bf16.mxu0 0
      %548 = vmatpush1.bf16.msra.mxu0 0
      %549 = vmatprep.subr.bf16.mxu0 0
      %550 = vmatpush1.bf16.msra.mxu0 0
      %551 = vmatprep.subr.bf16.mxu0 0
      %552 = vmatpush1.bf16.msra.mxu0 0
      %553 = vmatprep.subr.bf16.mxu0 0
      %554 = vmatpush1.bf16.msra.mxu0 0
      %555 = vmatprep.subr.bf16.mxu0 0
      %556 = vmatpush1.bf16.msra.mxu0 0
      %557 = vmatprep.subr.bf16.mxu0 0
      %558 = vmatpush1.bf16.msra.mxu0 0
      %559 = vmatprep.subr.bf16.mxu0 0
      %560 = vmatpush1.bf16.msra.mxu0 0
      %561 = vmatprep.subr.bf16.mxu0 0
      %562 = vmatpush1.bf16.msra.mxu0 0
      %563 = vmatprep.subr.bf16.mxu0 0
      %564 = vmatpush1.bf16.msra.mxu0 0
      %565 = vmatprep.subr.bf16.mxu0 0
      %566 = vmatpush1.bf16.msra.mxu0 0
      %567 = vmatprep.subr.bf16.mxu0 0
      %568 = vmatpush1.bf16.msra.mxu0 0
      %569 = vmatprep.subr.bf16.mxu0 0
      %570 = vmatpush1.bf16.msra.mxu0 0
      %571 = vmatprep.subr.bf16.mxu0 0
      %572 = vmatpush1.bf16.msra.mxu0 0
      %573 = vmatprep.subr.bf16.mxu0 0
      %574 = vmatpush1.bf16.msra.mxu0 0
      %575 = vmatprep.mubr.bf16.mxu0 0
      %576 = vmatmul.mubr.bf16.gmra.mrb[0].mxu0 %v538
      %v577 = vpop.f32.mrb[0].mxu0
      %v578 = vadd.f32 %v343, %v577
      %v579 = vpop.f32.mrb[0].mxu0
      %v580 = vpop.f32.mrb[0].mxu0
      %v581 = vadd.f32 %v343, %v580
      %v582 = vpop.f32.mrb[0].mxu0
      %583 = vmatprep.mubr.bf16.mxu0 0
      %584 = vmatmul.mubr.bf16.gmra.mrb[0].mxu0 %v541
      %v585 = vpop.f32.mrb[0].mxu0
      %v586 = vadd.f32 %v343, %v585
      %v587 = vpop.f32.mrb[0].mxu0
      %v588 = vpop.f32.mrb[0].mxu0
      %v589 = vadd.f32 %v343, %v588
      %v590 = vpop.f32.mrb[0].mxu0
      %591 = vdwg.mxu0
      %v592 = vmax.f32 %v578, 0.0
      %v593 = vmax.f32 %v581, 0.0
      %v594 = vmax.f32 %v586, 0.0
      %v595 = vmax.f32 %v589, 0.0
      %v596 = vmin.f32 %v592, 6.0
      %v597 = vmin.f32 %v593, 6.0
      %v598 = vmin.f32 %v594, 6.0
      %v599 = vmin.f32 %v595, 6.0
      %600 = vst.msk [vmem:[#allocation2 + $0x1] sm:$0xff] %vm504, %v596
      %601 = vst.msk [vmem:[#allocation2 + $0x9] sm:$0xff] %vm504, %v597
      %s602 = scalar_lea.vmem [#allocation2], 216
      %603 = vst.msk [vmem:[%s602 + $0x1] sm:$0xff] %vm504, %v598
      %604 = vst.msk [vmem:[%s602 + $0x9] sm:$0xff] %vm504, %v599
      %p605 = scmp.eq.s32.totalorder %s23, 1
      // Predicated region
      $region49: #{tpu_custom_call.1} parent=47 // pred_check
        %p606 = pneg %p605
      $region50: #{tpu_custom_call.1} parent=47 // pred_check_branch
        %608 = sbr.rel (%p606) target = $region52
      $region51: #{tpu_custom_call.1} parent=47 // pred_region
        %609 = vst.msk [vmem:[%s602 + $0x1] sm:$0xff] %vm504, 0.0
        %610 = vst.msk [vmem:[%s602 + $0x9] sm:$0xff] %vm504, 0.0
      $region52: #{tpu_custom_call.1} parent=47 // pred_fallthru
        _
      %p611 = scmp.eq.s32.totalorder %s23, 0
      // Predicated region
      $region53: #{tpu_custom_call.1} parent=47 // pred_check
        %p612 = pneg %p611
      $region54: #{tpu_custom_call.1} parent=47 // pred_check_branch
        %614 = sbr.rel (%p612) target = $region56
      $region55: #{tpu_custom_call.1} parent=47 // pred_region
        %615 = vst.msk [vmem:[#allocation2 + $0x1] sm:$0xff] %vm504, 0.0
        %616 = vst.msk [vmem:[#allocation2 + $0x9] sm:$0xff] %vm504, 0.0
      $region56: #{tpu_custom_call.1} parent=47 // pred_fallthru
        _
      %vm617 = vcmask 57344
      %618 = vst.msk [vmem:[#allocation2] sm:$0x1] %vm617, 0.0
      %619 = vst.msk [vmem:[#allocation2 + $0x18] sm:$0x1] %vm617, 0.0
      %620 = vst.msk [vmem:[#allocation2 + $0x30] sm:$0x1] %vm617, 0.0
      %621 = vst.msk [vmem:[#allocation2 + $0x48] sm:$0x1] %vm617, 0.0
      %622 = vst.msk [vmem:[#allocation2 + $0x60] sm:$0x1] %vm617, 0.0
      %623 = vst.msk [vmem:[#allocation2 + $0x78] sm:$0x1] %vm617, 0.0
      %624 = vst.msk [vmem:[#allocation2 + $0x90] sm:$0x1] %vm617, 0.0
      %625 = vst.msk [vmem:[#allocation2 + $0xa8] sm:$0x1] %vm617, 0.0
      %626 = vst.msk [vmem:[#allocation2 + $0xc0] sm:$0x1] %vm617, 0.0
      %627 = vst.msk [vmem:[#allocation2 + $0xd8] sm:$0x1] %vm617, 0.0
      %628 = vst.msk [vmem:[#allocation2 + $0x11] sm:$0x1] %vm617, 0.0
      %629 = vst.msk [vmem:[#allocation2 + $0x29] sm:$0x1] %vm617, 0.0
      %630 = vst.msk [vmem:[#allocation2 + $0x41] sm:$0x1] %vm617, 0.0
      %631 = vst.msk [vmem:[#allocation2 + $0x59] sm:$0x1] %vm617, 0.0
      %632 = vst.msk [vmem:[#allocation2 + $0x71] sm:$0x1] %vm617, 0.0
      %633 = vst.msk [vmem:[#allocation2 + $0x89] sm:$0x1] %vm617, 0.0
      %634 = vst.msk [vmem:[#allocation2 + $0xa1] sm:$0x1] %vm617, 0.0
      %635 = vst.msk [vmem:[#allocation2 + $0xb9] sm:$0x1] %vm617, 0.0
      %636 = vst.msk [vmem:[#allocation2 + $0xd1] sm:$0x1] %vm617, 0.0
      %637 = vst.msk [vmem:[#allocation2 + $0xe9] sm:$0x1] %vm617, 0.0
      %v638 = vld [vmem:[#allocation2] sm:$0xff]
      %v639 = vld [vmem:[#allocation2 + $0x8] sm:$0xff]
      %v640 = vld [vmem:[#allocation2 + $0x18] sm:$0xff]
      %v641 = vld [vmem:[#allocation2 + $0x20] sm:$0xff]
      %v642 = vld [vmem:[#allocation2 + $0x30] sm:$0xff]
      %v643 = vld [vmem:[#allocation2 + $0x38] sm:$0xff]
      %v644 = vld [vmem:[#allocation2 + $0x48] sm:$0xff]
      %v645 = vld [vmem:[#allocation2 + $0x50] sm:$0xff]
      %v646 = vld [vmem:[#allocation2 + $0x60] sm:$0xff]
      %v647 = vld [vmem:[#allocation2 + $0x68] sm:$0xff]
      %v648 = vld [vmem:[#allocation2 + $0x78] sm:$0xff]
      %v649 = vld [vmem:[#allocation2 + $0x80] sm:$0xff]
      %v650 = vld [vmem:[#allocation2 + $0x90] sm:$0xff]
      %v651 = vld [vmem:[#allocation2 + $0x98] sm:$0xff]
      %v652 = vld [vmem:[#allocation2 + $0xa8] sm:$0xff]
      %v653 = vld [vmem:[#allocation2 + $0xb0] sm:$0xff]
      %v654 = vld [vmem:[#allocation2 + $0xc0] sm:$0xff]
      %v655 = vld [vmem:[#allocation2 + $0xc8] sm:$0xff]
      %v656 = vld [vmem:[#allocation2 + $0xd8] sm:$0xff]
      %v657 = vld [vmem:[#allocation2 + $0xe0] sm:$0xff]
      %v658 = vlaneseq
      %v659 = vshrl.u32 %v658, 7
      %v660 = vsub.s32 0, %v659
      %v661 = vrot.slane %v308, %v660
      %v662 = vmul.f32 %v638, %v661
      %v663 = vmul.f32 %v639, %v661
      %v664 = vmul.f32 %v640, %v661
      %v665 = vmul.f32 %v641, %v661
      %v666 = vmul.f32 %v642, %v661
      %v667 = vmul.f32 %v643, %v661
      %v668 = vmul.f32 %v644, %v661
      %v669 = vmul.f32 %v645, %v661
      %v670 = vmul.f32 %v646, %v661
      %v671 = vmul.f32 %v647, %v661
      %v672 = vmul.f32 %v648, %v661
      %v673 = vmul.f32 %v649, %v661
      %v674 = vmul.f32 %v650, %v661
      %v675 = vmul.f32 %v651, %v661
      %v676 = vmul.f32 %v652, %v661
      %v677 = vmul.f32 %v653, %v661
      %v678 = vlaneseq
      %v679 = vshrl.u32 %v678, 7
      %v680 = vsub.s32 3, %v679
      %v681 = vrot.slane %v308, %v680
      %v682 = vmul.f32 %v640, %v681
      %v683 = vmul.f32 %v641, %v681
      %v684 = vmul.f32 %v642, %v681
      %v685 = vmul.f32 %v643, %v681
      %v686 = vmul.f32 %v644, %v681
      %v687 = vmul.f32 %v645, %v681
      %v688 = vmul.f32 %v646, %v681
      %v689 = vmul.f32 %v647, %v681
      %v690 = vmul.f32 %v648, %v681
      %v691 = vmul.f32 %v649, %v681
      %v692 = vmul.f32 %v650, %v681
      %v693 = vmul.f32 %v651, %v681
      %v694 = vmul.f32 %v652, %v681
      %v695 = vmul.f32 %v653, %v681
      %v696 = vmul.f32 %v654, %v681
      %v697 = vmul.f32 %v655, %v681
      %v698 = vadd.f32 %v662, %v682
      %v699 = vadd.f32 %v663, %v683
      %v700 = vadd.f32 %v664, %v684
      %v701 = vadd.f32 %v665, %v685
      %v702 = vadd.f32 %v666, %v686
      %v703 = vadd.f32 %v667, %v687
      %v704 = vadd.f32 %v668, %v688
      %v705 = vadd.f32 %v669, %v689
      %v706 = vadd.f32 %v670, %v690
      %v707 = vadd.f32 %v671, %v691
      %v708 = vadd.f32 %v672, %v692
      %v709 = vadd.f32 %v673, %v693
      %v710 = vadd.f32 %v674, %v694
      %v711 = vadd.f32 %v675, %v695
      %v712 = vadd.f32 %v676, %v696
      %v713 = vadd.f32 %v677, %v697
      %v714 = vlaneseq
      %v715 = vshrl.u32 %v714, 7
      %v716 = vsub.s32 6, %v715
      %v717 = vrot.slane %v308, %v716
      %v718 = vmul.f32 %v642, %v717
      %v719 = vmul.f32 %v643, %v717
      %v720 = vmul.f32 %v644, %v717
      %v721 = vmul.f32 %v645, %v717
      %v722 = vmul.f32 %v646, %v717
      %v723 = vmul.f32 %v647, %v717
      %v724 = vmul.f32 %v648, %v717
      %v725 = vmul.f32 %v649, %v717
      %v726 = vmul.f32 %v650, %v717
      %v727 = vmul.f32 %v651, %v717
      %v728 = vmul.f32 %v652, %v717
      %v729 = vmul.f32 %v653, %v717
      %v730 = vmul.f32 %v654, %v717
      %v731 = vmul.f32 %v655, %v717
      %v732 = vmul.f32 %v656, %v717
      %v733 = vmul.f32 %v657, %v717
      %v734 = vadd.f32 %v698, %v718
      %v735 = vadd.f32 %v699, %v719
      %v736 = vadd.f32 %v700, %v720
      %v737 = vadd.f32 %v701, %v721
      %v738 = vadd.f32 %v702, %v722
      %v739 = vadd.f32 %v703, %v723
      %v740 = vadd.f32 %v704, %v724
      %v741 = vadd.f32 %v705, %v725
      %v742 = vadd.f32 %v706, %v726
      %v743 = vadd.f32 %v707, %v727
      %v744 = vadd.f32 %v708, %v728
      %v745 = vadd.f32 %v709, %v729
      %v746 = vadd.f32 %v710, %v730
      %v747 = vadd.f32 %v711, %v731
      %v748 = vadd.f32 %v712, %v732
      %v749 = vadd.f32 %v713, %v733
      %v750 = vld [vmem:[#allocation2 + $0x1] sm:$0xff]
      %v751 = vld [vmem:[#allocation2 + $0x9] sm:$0xff]
      %v752 = vld [vmem:[#allocation2 + $0x19] sm:$0xff]
      %v753 = vld [vmem:[#allocation2 + $0x21] sm:$0xff]
      %v754 = vld [vmem:[#allocation2 + $0x31] sm:$0xff]
      %v755 = vld [vmem:[#allocation2 + $0x39] sm:$0xff]
      %v756 = vld [vmem:[#allocation2 + $0x49] sm:$0xff]
      %v757 = vld [vmem:[#allocation2 + $0x51] sm:$0xff]
      %v758 = vld [vmem:[#allocation2 + $0x61] sm:$0xff]
      %v759 = vld [vmem:[#allocation2 + $0x69] sm:$0xff]
      %v760 = vld [vmem:[#allocation2 + $0x79] sm:$0xff]
      %v761 = vld [vmem:[#allocation2 + $0x81] sm:$0xff]
      %v762 = vld [vmem:[#allocation2 + $0x91] sm:$0xff]
      %v763 = vld [vmem:[#allocation2 + $0x99] sm:$0xff]
      %v764 = vld [vmem:[#allocation2 + $0xa9] sm:$0xff]
      %v765 = vld [vmem:[#allocation2 + $0xb1] sm:$0xff]
      %v766 = vld [vmem:[#allocation2 + $0xc1] sm:$0xff]
      %v767 = vld [vmem:[#allocation2 + $0xc9] sm:$0xff]
      %v768 = vld [vmem:[#allocation2 + $0xd9] sm:$0xff]
      %v769 = vld [vmem:[#allocation2 + $0xe1] sm:$0xff]
      %v770 = vlaneseq
      %v771 = vshrl.u32 %v770, 7
      %v772 = vsub.s32 1, %v771
      %v773 = vrot.slane %v308, %v772
      %v774 = vmul.f32 %v750, %v773
      %v775 = vmul.f32 %v751, %v773
      %v776 = vmul.f32 %v752, %v773
      %v777 = vmul.f32 %v753, %v773
      %v778 = vmul.f32 %v754, %v773
      %v779 = vmul.f32 %v755, %v773
      %v780 = vmul.f32 %v756, %v773
      %v781 = vmul.f32 %v757, %v773
      %v782 = vmul.f32 %v758, %v773
      %v783 = vmul.f32 %v759, %v773
      %v784 = vmul.f32 %v760, %v773
      %v785 = vmul.f32 %v761, %v773
      %v786 = vmul.f32 %v762, %v773
      %v787 = vmul.f32 %v763, %v773
      %v788 = vmul.f32 %v764, %v773
      %v789 = vmul.f32 %v765, %v773
      %v790 = vadd.f32 %v734, %v774
      %v791 = vadd.f32 %v735, %v775
      %v792 = vadd.f32 %v736, %v776
      %v793 = vadd.f32 %v737, %v777
      %v794 = vadd.f32 %v738, %v778
      %v795 = vadd.f32 %v739, %v779
      %v796 = vadd.f32 %v740, %v780
      %v797 = vadd.f32 %v741, %v781
      %v798 = vadd.f32 %v742, %v782
      %v799 = vadd.f32 %v743, %v783
      %v800 = vadd.f32 %v744, %v784
      %v801 = vadd.f32 %v745, %v785
      %v802 = vadd.f32 %v746, %v786
      %v803 = vadd.f32 %v747, %v787
      %v804 = vadd.f32 %v748, %v788
      %v805 = vadd.f32 %v749, %v789
      %v806 = vlaneseq
      %v807 = vshrl.u32 %v806, 7
      %v808 = vsub.s32 4, %v807
      %v809 = vrot.slane %v308, %v808
      %v810 = vmul.f32 %v752, %v809
      %v811 = vmul.f32 %v753, %v809
      %v812 = vmul.f32 %v754, %v809
      %v813 = vmul.f32 %v755, %v809
      %v814 = vmul.f32 %v756, %v809
      %v815 = vmul.f32 %v757, %v809
      %v816 = vmul.f32 %v758, %v809
      %v817 = vmul.f32 %v759, %v809
      %v818 = vmul.f32 %v760, %v809
      %v819 = vmul.f32 %v761, %v809
      %v820 = vmul.f32 %v762, %v809
      %v821 = vmul.f32 %v763, %v809
      %v822 = vmul.f32 %v764, %v809
      %v823 = vmul.f32 %v765, %v809
      %v824 = vmul.f32 %v766, %v809
      %v825 = vmul.f32 %v767, %v809
      %v826 = vadd.f32 %v790, %v810
      %v827 = vadd.f32 %v791, %v811
      %v828 = vadd.f32 %v792, %v812
      %v829 = vadd.f32 %v793, %v813
      %v830 = vadd.f32 %v794, %v814
      %v831 = vadd.f32 %v795, %v815
      %v832 = vadd.f32 %v796, %v816
      %v833 = vadd.f32 %v797, %v817
      %v834 = vadd.f32 %v798, %v818
      %v835 = vadd.f32 %v799, %v819
      %v836 = vadd.f32 %v800, %v820
      %v837 = vadd.f32 %v801, %v821
      %v838 = vadd.f32 %v802, %v822
      %v839 = vadd.f32 %v803, %v823
      %v840 = vadd.f32 %v804, %v824
      %v841 = vadd.f32 %v805, %v825
      %v842 = vlaneseq
      %v843 = vshrl.u32 %v842, 7
      %v844 = vsub.s32 7, %v843
      %v845 = vrot.slane %v308, %v844
      %v846 = vmul.f32 %v754, %v845
      %v847 = vmul.f32 %v755, %v845
      %v848 = vmul.f32 %v756, %v845
      %v849 = vmul.f32 %v757, %v845
      %v850 = vmul.f32 %v758, %v845
      %v851 = vmul.f32 %v759, %v845
      %v852 = vmul.f32 %v760, %v845
      %v853 = vmul.f32 %v761, %v845
      %v854 = vmul.f32 %v762, %v845
      %v855 = vmul.f32 %v763, %v845
      %v856 = vmul.f32 %v764, %v845
      %v857 = vmul.f32 %v765, %v845
      %v858 = vmul.f32 %v766, %v845
      %v859 = vmul.f32 %v767, %v845
      %v860 = vmul.f32 %v768, %v845
      %v861 = vmul.f32 %v769, %v845
      %v862 = vadd.f32 %v826, %v846
      %v863 = vadd.f32 %v827, %v847
      %v864 = vadd.f32 %v828, %v848
      %v865 = vadd.f32 %v829, %v849
      %v866 = vadd.f32 %v830, %v850
      %v867 = vadd.f32 %v831, %v851
      %v868 = vadd.f32 %v832, %v852
      %v869 = vadd.f32 %v833, %v853
      %v870 = vadd.f32 %v834, %v854
      %v871 = vadd.f32 %v835, %v855
      %v872 = vadd.f32 %v836, %v856
      %v873 = vadd.f32 %v837, %v857
      %v874 = vadd.f32 %v838, %v858
      %v875 = vadd.f32 %v839, %v859
      %v876 = vadd.f32 %v840, %v860
      %v877 = vadd.f32 %v841, %v861
      %v878 = vld [vmem:[#allocation2 + $0x2] sm:$0xff]
      %v879 = vld [vmem:[#allocation2 + $0xa] sm:$0xff]
      %v880 = vld [vmem:[#allocation2 + $0x1a] sm:$0xff]
      %v881 = vld [vmem:[#allocation2 + $0x22] sm:$0xff]
      %v882 = vld [vmem:[#allocation2 + $0x32] sm:$0xff]
      %v883 = vld [vmem:[#allocation2 + $0x3a] sm:$0xff]
      %v884 = vld [vmem:[#allocation2 + $0x4a] sm:$0xff]
      %v885 = vld [vmem:[#allocation2 + $0x52] sm:$0xff]
      %v886 = vld [vmem:[#allocation2 + $0x62] sm:$0xff]
      %v887 = vld [vmem:[#allocation2 + $0x6a] sm:$0xff]
      %v888 = vld [vmem:[#allocation2 + $0x7a] sm:$0xff]
      %v889 = vld [vmem:[#allocation2 + $0x82] sm:$0xff]
      %v890 = vld [vmem:[#allocation2 + $0x92] sm:$0xff]
      %v891 = vld [vmem:[#allocation2 + $0x9a] sm:$0xff]
      %v892 = vld [vmem:[#allocation2 + $0xaa] sm:$0xff]
      %v893 = vld [vmem:[#allocation2 + $0xb2] sm:$0xff]
      %v894 = vld [vmem:[#allocation2 + $0xc2] sm:$0xff]
      %v895 = vld [vmem:[#allocation2 + $0xca] sm:$0xff]
      %v896 = vld [vmem:[#allocation2 + $0xda] sm:$0xff]
      %v897 = vld [vmem:[#allocation2 + $0xe2] sm:$0xff]
      %v898 = vlaneseq
      %v899 = vshrl.u32 %v898, 7
      %v900 = vsub.s32 2, %v899
      %v901 = vrot.slane %v308, %v900
      %v902 = vmul.f32 %v878, %v901
      %v903 = vmul.f32 %v879, %v901
      %v904 = vmul.f32 %v880, %v901
      %v905 = vmul.f32 %v881, %v901
      %v906 = vmul.f32 %v882, %v901
      %v907 = vmul.f32 %v883, %v901
      %v908 = vmul.f32 %v884, %v901
      %v909 = vmul.f32 %v885, %v901
      %v910 = vmul.f32 %v886, %v901
      %v911 = vmul.f32 %v887, %v901
      %v912 = vmul.f32 %v888, %v901
      %v913 = vmul.f32 %v889, %v901
      %v914 = vmul.f32 %v890, %v901
      %v915 = vmul.f32 %v891, %v901
      %v916 = vmul.f32 %v892, %v901
      %v917 = vmul.f32 %v893, %v901
      %v918 = vadd.f32 %v862, %v902
      %v919 = vadd.f32 %v863, %v903
      %v920 = vadd.f32 %v864, %v904
      %v921 = vadd.f32 %v865, %v905
      %v922 = vadd.f32 %v866, %v906
      %v923 = vadd.f32 %v867, %v907
      %v924 = vadd.f32 %v868, %v908
      %v925 = vadd.f32 %v869, %v909
      %v926 = vadd.f32 %v870, %v910
      %v927 = vadd.f32 %v871, %v911
      %v928 = vadd.f32 %v872, %v912
      %v929 = vadd.f32 %v873, %v913
      %v930 = vadd.f32 %v874, %v914
      %v931 = vadd.f32 %v875, %v915
      %v932 = vadd.f32 %v876, %v916
      %v933 = vadd.f32 %v877, %v917
      %v934 = vlaneseq
      %v935 = vshrl.u32 %v934, 7
      %v936 = vsub.s32 5, %v935
      %v937 = vrot.slane %v308, %v936
      %v938 = vmul.f32 %v880, %v937
      %v939 = vmul.f32 %v881, %v937
      %v940 = vmul.f32 %v882, %v937
      %v941 = vmul.f32 %v883, %v937
      %v942 = vmul.f32 %v884, %v937
      %v943 = vmul.f32 %v885, %v937
      %v944 = vmul.f32 %v886, %v937
      %v945 = vmul.f32 %v887, %v937
      %v946 = vmul.f32 %v888, %v937
      %v947 = vmul.f32 %v889, %v937
      %v948 = vmul.f32 %v890, %v937
      %v949 = vmul.f32 %v891, %v937
      %v950 = vmul.f32 %v892, %v937
      %v951 = vmul.f32 %v893, %v937
      %v952 = vmul.f32 %v894, %v937
      %v953 = vmul.f32 %v895, %v937
      %v954 = vadd.f32 %v918, %v938
      %v955 = vadd.f32 %v919, %v939
      %v956 = vadd.f32 %v920, %v940
      %v957 = vadd.f32 %v921, %v941
      %v958 = vadd.f32 %v922, %v942
      %v959 = vadd.f32 %v923, %v943
      %v960 = vadd.f32 %v924, %v944
      %v961 = vadd.f32 %v925, %v945
      %v962 = vadd.f32 %v926, %v946
      %v963 = vadd.f32 %v927, %v947
      %v964 = vadd.f32 %v928, %v948
      %v965 = vadd.f32 %v929, %v949
      %v966 = vadd.f32 %v930, %v950
      %v967 = vadd.f32 %v931, %v951
      %v968 = vadd.f32 %v932, %v952
      %v969 = vadd.f32 %v933, %v953
      %v970 = vlaneseq
      %v971 = vshrl.u32 %v970, 7
      %v972 = vsub.s32 0, %v971
      %v973 = vrot.slane %v309, %v972
      %v974 = vmul.f32 %v882, %v973
      %v975 = vmul.f32 %v883, %v973
      %v976 = vmul.f32 %v884, %v973
      %v977 = vmul.f32 %v885, %v973
      %v978 = vmul.f32 %v886, %v973
      %v979 = vmul.f32 %v887, %v973
      %v980 = vmul.f32 %v888, %v973
      %v981 = vmul.f32 %v889, %v973
      %v982 = vmul.f32 %v890, %v973
      %v983 = vmul.f32 %v891, %v973
      %v984 = vmul.f32 %v892, %v973
      %v985 = vmul.f32 %v893, %v973
      %v986 = vmul.f32 %v894, %v973
      %v987 = vmul.f32 %v895, %v973
      %v988 = vmul.f32 %v896, %v973
      %v989 = vmul.f32 %v897, %v973
      %v990 = vadd.f32 %v954, %v974
      %v991 = vadd.f32 %v955, %v975
      %v992 = vadd.f32 %v956, %v976
      %v993 = vadd.f32 %v957, %v977
      %v994 = vadd.f32 %v958, %v978
      %v995 = vadd.f32 %v959, %v979
      %v996 = vadd.f32 %v960, %v980
      %v997 = vadd.f32 %v961, %v981
      %v998 = vadd.f32 %v962, %v982
      %v999 = vadd.f32 %v963, %v983
      %v1000 = vadd.f32 %v964, %v984
      %v1001 = vadd.f32 %v965, %v985
      %v1002 = vadd.f32 %v966, %v986
      %v1003 = vadd.f32 %v967, %v987
      %v1004 = vadd.f32 %v968, %v988
      %v1005 = vadd.f32 %v969, %v989
      %v1007 = vlaneseq
      %v1008 = vshrl.u32 %v1007, 7
      %v1009 = vsub.s32 0, %v1008
      %v1010 = vrot.slane %v310, %v1009
      %v1012 = vadd.f32 %v990, %v1010
      %v1013 = vadd.f32 %v991, %v1010
      %v1014 = vadd.f32 %v992, %v1010
      %v1015 = vadd.f32 %v993, %v1010
      %v1016 = vadd.f32 %v994, %v1010
      %v1017 = vadd.f32 %v995, %v1010
      %v1018 = vadd.f32 %v996, %v1010
      %v1019 = vadd.f32 %v997, %v1010
      %v1020 = vadd.f32 %v998, %v1010
      %v1021 = vadd.f32 %v999, %v1010
      %v1022 = vadd.f32 %v1000, %v1010
      %v1023 = vadd.f32 %v1001, %v1010
      %v1024 = vadd.f32 %v1002, %v1010
      %v1025 = vadd.f32 %v1003, %v1010
      %v1026 = vadd.f32 %v1004, %v1010
      %v1027 = vadd.f32 %v1005, %v1010
      %v1028 = vmax.f32 %v1012, 0.0
      %v1029 = vmax.f32 %v1013, 0.0
      %v1030 = vmax.f32 %v1014, 0.0
      %v1031 = vmax.f32 %v1015, 0.0
      %v1032 = vmax.f32 %v1016, 0.0
      %v1033 = vmax.f32 %v1017, 0.0
      %v1034 = vmax.f32 %v1018, 0.0
      %v1035 = vmax.f32 %v1019, 0.0
      %v1036 = vmax.f32 %v1020, 0.0
      %v1037 = vmax.f32 %v1021, 0.0
      %v1038 = vmax.f32 %v1022, 0.0
      %v1039 = vmax.f32 %v1023, 0.0
      %v1040 = vmax.f32 %v1024, 0.0
      %v1041 = vmax.f32 %v1025, 0.0
      %v1042 = vmax.f32 %v1026, 0.0
      %v1043 = vmax.f32 %v1027, 0.0
      %v1044 = vmin.f32 %v1028, 6.0
      %v1045 = vmin.f32 %v1029, 6.0
      %v1046 = vmin.f32 %v1030, 6.0
      %v1047 = vmin.f32 %v1031, 6.0
      %v1048 = vmin.f32 %v1032, 6.0
      %v1049 = vmin.f32 %v1033, 6.0
      %v1050 = vmin.f32 %v1034, 6.0
      %v1051 = vmin.f32 %v1035, 6.0
      %v1052 = vmin.f32 %v1036, 6.0
      %v1053 = vmin.f32 %v1037, 6.0
      %v1054 = vmin.f32 %v1038, 6.0
      %v1055 = vmin.f32 %v1039, 6.0
      %v1056 = vmin.f32 %v1040, 6.0
      %v1057 = vmin.f32 %v1041, 6.0
      %v1058 = vmin.f32 %v1042, 6.0
      %v1059 = vmin.f32 %v1043, 6.0
      %v1060 = vpack.c.bf16 %v1045, %v1044
      %v1061 = vpack.c.bf16 %v1047, %v1046
      %v1062 = vpack.c.bf16 %v1049, %v1048
      %v1063 = vpack.c.bf16 %v1051, %v1050
      %v1064 = vpack.c.bf16 %v1053, %v1052
      %v1065 = vpack.c.bf16 %v1055, %v1054
      %v1066 = vpack.c.bf16 %v1057, %v1056
      %v1067 = vpack.c.bf16 %v1059, %v1058
      %v1069 = vlaneseq
      %v1070 = vshrl.u32 %v1069, 7
      %v1071 = vsub.s32 0, %v1070
      %v1072 = vrot.slane %v312, %v1071
      %v1075 = vsel %vm504, %v1060, 0
      %v1078 = vsel %vm504, %v1061, 0
      %v1081 = vsel %vm504, %v1062, 0
      %v1084 = vsel %vm504, %v1063, 0
      %v1087 = vsel %vm504, %v1064, 0
      %v1090 = vsel %vm504, %v1065, 0
      %v1093 = vsel %vm504, %v1066, 0
      %v1096 = vsel %vm504, %v1067, 0
      %vm1098 = vcmask 1043456
      %v1100 = vsel %vm1098, %v311, 0
      %1102 = vmatprep.subr.bf16.mxu0 0
      %1103 = vmatpush1.bf16.msra.mxu0 %v1100
      %1104 = vmatprep.subr.bf16.mxu0 0
      %1105 = vmatpush1.bf16.msra.mxu0 0
      %1106 = vmatprep.subr.bf16.mxu0 0
      %1107 = vmatpush1.bf16.msra.mxu0 0
      %1108 = vmatprep.subr.bf16.mxu0 0
      %1109 = vmatpush1.bf16.msra.mxu0 0
      %1110 = vmatprep.subr.bf16.mxu0 0
      %1111 = vmatpush1.bf16.msra.mxu0 0
      %1112 = vmatprep.subr.bf16.mxu0 0
      %1113 = vmatpush1.bf16.msra.mxu0 0
      %1114 = vmatprep.subr.bf16.mxu0 0
      %1115 = vmatpush1.bf16.msra.mxu0 0
      %1116 = vmatprep.subr.bf16.mxu0 0
      %1117 = vmatpush1.bf16.msra.mxu0 0
      %1118 = vmatprep.subr.bf16.mxu0 0
      %1119 = vmatpush1.bf16.msra.mxu0 0
      %1120 = vmatprep.subr.bf16.mxu0 0
      %1121 = vmatpush1.bf16.msra.mxu0 0
      %1122 = vmatprep.subr.bf16.mxu0 0
      %1123 = vmatpush1.bf16.msra.mxu0 0
      %1124 = vmatprep.subr.bf16.mxu0 0
      %1125 = vmatpush1.bf16.msra.mxu0 0
      %1126 = vmatprep.subr.bf16.mxu0 0
      %1127 = vmatpush1.bf16.msra.mxu0 0
      %1128 = vmatprep.subr.bf16.mxu0 0
      %1129 = vmatpush1.bf16.msra.mxu0 0
      %1130 = vmatprep.subr.bf16.mxu0 0
      %1131 = vmatpush1.bf16.msra.mxu0 0
      %1132 = vmatprep.subr.bf16.mxu0 0
      %1133 = vmatpush1.bf16.msra.mxu0 0
      %1134 = vmatprep.mubr.bf16.mxu0 0
      %1135 = vmatmul.mubr.bf16.gmra.mrb[0].mxu0 %v1075
      %v1136 = vpop.f32.mrb[0].mxu0
      %v1137 = vadd.f32 %v1072, %v1136
      %v1138 = vpop.f32.mrb[0].mxu0
      %v1139 = vpop.f32.mrb[0].mxu0
      %v1140 = vadd.f32 %v1072, %v1139
      %v1141 = vpop.f32.mrb[0].mxu0
      %1142 = vmatprep.mubr.bf16.mxu0 0
      %1143 = vmatmul.mubr.bf16.gmra.mrb[0].mxu0 %v1078
      %v1144 = vpop.f32.mrb[0].mxu0
      %v1145 = vadd.f32 %v1072, %v1144
      %v1146 = vpop.f32.mrb[0].mxu0
      %v1147 = vpop.f32.mrb[0].mxu0
      %v1148 = vadd.f32 %v1072, %v1147
      %v1149 = vpop.f32.mrb[0].mxu0
      %1150 = vmatprep.mubr.bf16.mxu0 0
      %1151 = vmatmul.mubr.bf16.gmra.mrb[0].mxu0 %v1081
      %v1152 = vpop.f32.mrb[0].mxu0
      %v1153 = vadd.f32 %v1072, %v1152
      %v1154 = vpop.f32.mrb[0].mxu0
      %v1155 = vpop.f32.mrb[0].mxu0
      %v1156 = vadd.f32 %v1072, %v1155
      %v1157 = vpop.f32.mrb[0].mxu0
      %1158 = vmatprep.mubr.bf16.mxu0 0
      %1159 = vmatmul.mubr.bf16.gmra.mrb[0].mxu0 %v1084
      %v1160 = vpop.f32.mrb[0].mxu0
      %v1161 = vadd.f32 %v1072, %v1160
      %v1162 = vpop.f32.mrb[0].mxu0
      %v1163 = vpop.f32.mrb[0].mxu0
      %v1164 = vadd.f32 %v1072, %v1163
      %v1165 = vpop.f32.mrb[0].mxu0
      %1166 = vmatprep.mubr.bf16.mxu0 0
      %1167 = vmatmul.mubr.bf16.gmra.mrb[0].mxu0 %v1087
      %v1168 = vpop.f32.mrb[0].mxu0
      %v1169 = vadd.f32 %v1072, %v1168
      %v1170 = vpop.f32.mrb[0].mxu0
      %v1171 = vpop.f32.mrb[0].mxu0
      %v1172 = vadd.f32 %v1072, %v1171
      %v1173 = vpop.f32.mrb[0].mxu0
      %1174 = vmatprep.mubr.bf16.mxu0 0
      %1175 = vmatmul.mubr.bf16.gmra.mrb[0].mxu0 %v1090
      %v1176 = vpop.f32.mrb[0].mxu0
      %v1177 = vadd.f32 %v1072, %v1176
      %v1178 = vpop.f32.mrb[0].mxu0
      %v1179 = vpop.f32.mrb[0].mxu0
      %v1180 = vadd.f32 %v1072, %v1179
      %v1181 = vpop.f32.mrb[0].mxu0
      %1182 = vmatprep.mubr.bf16.mxu0 0
      %1183 = vmatmul.mubr.bf16.gmra.mrb[0].mxu0 %v1093
      %v1184 = vpop.f32.mrb[0].mxu0
      %v1185 = vadd.f32 %v1072, %v1184
      %v1186 = vpop.f32.mrb[0].mxu0
      %v1187 = vpop.f32.mrb[0].mxu0
      %v1188 = vadd.f32 %v1072, %v1187
      %v1189 = vpop.f32.mrb[0].mxu0
      %1190 = vmatprep.mubr.bf16.mxu0 0
      %1191 = vmatmul.mubr.bf16.gmra.mrb[0].mxu0 %v1096
      %v1192 = vpop.f32.mrb[0].mxu0
      %v1193 = vadd.f32 %v1072, %v1192
      %v1194 = vpop.f32.mrb[0].mxu0
      %v1195 = vpop.f32.mrb[0].mxu0
      %v1196 = vadd.f32 %v1072, %v1195
      %v1197 = vpop.f32.mrb[0].mxu0
      %1198 = vdwg.mxu0
      %v1199 = vld [vmem:[%s314] sm:$0xff]
      %v1200 = vld [vmem:[%s314 + $0x8] sm:$0xff]
      %v1201 = vld [vmem:[%s314 + $0x10] sm:$0xff]
      %v1202 = vld [vmem:[%s314 + $0x18] sm:$0xff]
      %v1203 = vld [vmem:[%s314 + $0x20] sm:$0xff]
      %v1204 = vld [vmem:[%s314 + $0x28] sm:$0xff]
      %v1205 = vld [vmem:[%s314 + $0x30] sm:$0xff]
      %v1206 = vld [vmem:[%s314 + $0x38] sm:$0xff]
      %v1207 = vld [vmem:[%s314 + $0x40] sm:$0xff]
      %v1208 = vld [vmem:[%s314 + $0x48] sm:$0xff]
      %v1209 = vld [vmem:[%s314 + $0x50] sm:$0xff]
      %v1210 = vld [vmem:[%s314 + $0x58] sm:$0xff]
      %v1211 = vld [vmem:[%s314 + $0x60] sm:$0xff]
      %v1212 = vld [vmem:[%s314 + $0x68] sm:$0xff]
      %v1213 = vld [vmem:[%s314 + $0x70] sm:$0xff]
      %v1214 = vld [vmem:[%s314 + $0x78] sm:$0xff]
      %v1215 = vadd.f32 %v1137, %v1199
      %v1216 = vadd.f32 %v1140, %v1200
      %v1217 = vadd.f32 %v1145, %v1201
      %v1218 = vadd.f32 %v1148, %v1202
      %v1219 = vadd.f32 %v1153, %v1203
      %v1220 = vadd.f32 %v1156, %v1204
      %v1221 = vadd.f32 %v1161, %v1205
      %v1222 = vadd.f32 %v1164, %v1206
      %v1223 = vadd.f32 %v1169, %v1207
      %v1224 = vadd.f32 %v1172, %v1208
      %v1225 = vadd.f32 %v1177, %v1209
      %v1226 = vadd.f32 %v1180, %v1210
      %v1227 = vadd.f32 %v1185, %v1211
      %v1228 = vadd.f32 %v1188, %v1212
      %v1229 = vadd.f32 %v1193, %v1213
      %v1230 = vadd.f32 %v1196, %v1214
      %1231 = vst.msk [vmem:[%s302] sm:$0xff] %vm345, %v1215
      %1232 = vst.msk [vmem:[%s302 + $0x8] sm:$0xff] %vm345, %v1216
      %1233 = vst.msk [vmem:[%s302 + $0x10] sm:$0xff] %vm345, %v1217
      %1234 = vst.msk [vmem:[%s302 + $0x18] sm:$0xff] %vm345, %v1218
      %1235 = vst.msk [vmem:[%s302 + $0x20] sm:$0xff] %vm345, %v1219
      %1236 = vst.msk [vmem:[%s302 + $0x28] sm:$0xff] %vm345, %v1220
      %1237 = vst.msk [vmem:[%s302 + $0x30] sm:$0xff] %vm345, %v1221
      %1238 = vst.msk [vmem:[%s302 + $0x38] sm:$0xff] %vm345, %v1222
      %1239 = vst.msk [vmem:[%s302 + $0x40] sm:$0xff] %vm345, %v1223
      %1240 = vst.msk [vmem:[%s302 + $0x48] sm:$0xff] %vm345, %v1224
      %1241 = vst.msk [vmem:[%s302 + $0x50] sm:$0xff] %vm345, %v1225
      %1242 = vst.msk [vmem:[%s302 + $0x58] sm:$0xff] %vm345, %v1226
      %1243 = vst.msk [vmem:[%s302 + $0x60] sm:$0xff] %vm345, %v1227
      %1244 = vst.msk [vmem:[%s302 + $0x68] sm:$0xff] %vm345, %v1228
      %1245 = vst.msk [vmem:[%s302 + $0x70] sm:$0xff] %vm345, %v1229
      %1246 = vst.msk [vmem:[%s302 + $0x78] sm:$0xff] %vm345, %v1230
      %s1247 = smul.u32 8, %s23
      %p1248 = scmp.lt.s32.totalorder %s22, 1
      %s1249 = scalar_select %p1248, %s22, 1
      %p1250 = scmp.lt.s32.totalorder %s1247, 15
      %s1251 = scalar_select %p1250, %s1247, 15
      %s1252 = smul.addr %s1251, 2
      %s1253 = smul.addr %s1249, 32
      %s1254 = sadd.s32 %s1252, %s1253
      %s1255 = smul.addr %s1254, 8
      %s1256 = scalar_lea.vmem %s7, %s1255
      // Predicated region
      $region57: #{tpu_custom_call.1} parent=47 // pred_check
        %p1257 = pneg %p202
      $region58: #{tpu_custom_call.1} parent=47 // pred_check_branch
        %1259 = sbr.rel (%p1257) target = $region60
      $region59: #{tpu_custom_call.1} parent=47 // pred_region
        %s1260 = smul.u32 8, %s23
      $region60: #{tpu_custom_call.1} parent=47 // pred_fallthru
        _
    $region48: #{tpu_custom_call.1} parent=5 // pred_fallthru
      _
    %p1261 = scmp.le.s32.totalorder 2, %s13
    // Predicated region
    $region61: #{tpu_custom_call.1} parent=5 // pred_check
      %p1262 = pneg %p1261
    $region62: #{tpu_custom_call.1} parent=5 // pred_check_branch
      %1264 = sbr.rel (%p1262) target = $region64
    $region63: #{tpu_custom_call.1} parent=5 // pred_region
      %s1265 = ssub.s32 %s13, 2
      // Predicated region
      $region65: #{tpu_custom_call.1} parent=63 // pred_check
        %p1266 = pneg %p208
      $region66: #{tpu_custom_call.1} parent=63 // pred_check_branch
        %1268 = sbr.rel (%p1266) target = $region68
      $region67: #{tpu_custom_call.1} parent=63 // pred_region
        %s1269 = smul.u32 8, %s25
        %p1270 = scmp.lt.s32.totalorder %s24, 1
        %s1271 = scalar_select %p1270, %s24, 1
        %p1272 = scmp.lt.s32.totalorder %s1269, 15
        %s1273 = scalar_select %p1272, %s1269, 15
        %s1274 = smul.addr %s1273, 2
        %s1275 = smul.addr %s1271, 32
        %s1276 = sadd.s32 %s1274, %s1275
        %s1277 = smul.addr %s1276, 8
        %s1278 = scalar_lea.vmem %s7, %s1277
      $region68: #{tpu_custom_call.1} parent=63 // pred_fallthru
        _
    $region64: #{tpu_custom_call.1} parent=5 // pred_fallthru
      _
  $region6: #{tpu_custom_call.1} parent=0 // loop_footer
    %s17 = sadd.s32 1, %s13
  $region7: #{tpu_custom_call.1} parent=0 // loop_footer_branch
    %12 = sbr.rel target = $region3
  $region8: #{tpu_custom_call.1} parent=0 // loop_exit
    _

</llo_original>
